<compile_context>
chip_gen: v7x
topology: tpu7x:2x2x1
jax: 0.10.0
libtpu: 0.0.40
codegen_flags: <defaults>
</compile_context>

<pallas_src>
import functools

import jax
import jax.numpy as jnp
from jax.experimental import pallas as pl
from jax.experimental.pallas import tpu as pltpu

LAYER = 128   # hidden channels
N_MID = 4     # number of middle conv layers
K = 3         # conv kernel size


def _pick_tb(batch, seq_len):
    """Batch tile: target tb*L rows in [512, 2048], minimize batch padding,
    keep tb*L a multiple of 8 whenever the grid has more than one step."""
    cap = max(1, min(batch, 4096 // max(seq_len, 1)))
    best_tb, best_key = None, None
    for tb in range(1, cap + 1):
        g = pl.cdiv(batch, tb)
        rows = tb * seq_len
        if g > 1 and rows % 8:          # partial blocks must be sublane-aligned
            continue
        pad = g * tb - batch
        rows_pen = 0 if 512 <= rows <= 2048 else min(abs(rows - 512),
                                                     abs(rows - 2048))
        key = (rows_pen, pad, g)
        if best_key is None or key < best_key:
            best_tb, best_key = tb, key
    # Fallback: one full-array block is always BlockSpec-legal.
    return best_tb if best_tb is not None else batch


def cnn_kernel(x_ref, w_in_ref, b_in_ref, w_c_ref, b_c_ref,
               w_out_ref, b_out_ref, o_ref, *, tb, seq_len):
    tl = tb * seq_len            # packed (batch-tile x length) rows
    cd = w_c_ref.dtype           # MXU compute dtype (bf16 default, f32 opt.)

    # 0/1 masks zeroing rows whose conv neighbour lies in a different sample
    # (reproduces per-sample zero padding inside the packed slab). Built once
    # per step from iota and already broadcast to full lane width.
    pos = jax.lax.broadcasted_iota(jnp.int32, (tl, LAYER), 0) % seq_len
    keep_prev = (pos != 0).astype(jnp.float32)            # zeros row l == 0
    keep_next = (pos != seq_len - 1).astype(jnp.float32)  # zeros row l == L-1

    # ---- input conv (Cin=3): one small MXU matmul over the pre-packed taps --
    h = jnp.dot(x_ref[...], w_in_ref[...],
                preferred_element_type=jnp.float32) + b_in_ref[...]   # (tl,128)

    # ---- 4 x (Conv1d(128,128,k=3) -> ReLU): one fused K=384 matmul each -----
    # TODO(synk): on v5e consider three accumulating K=128 dots instead of the
    # fused K=384 form (v5e MXU is 128-deep, skips the (tl,384) lhs slab).
    for layer in range(N_MID):
        h_prev = keep_prev * pltpu.roll(h, 1, axis=0)       # h[l-1], XLU shift
        h_next = keep_next * pltpu.roll(h, tl - 1, axis=0)  # h[l+1]
        lhs = jnp.concatenate([h_prev, h, h_next], axis=1).astype(cd)  # (tl,384)
        acc = jnp.dot(lhs, w_c_ref[layer], preferred_element_type=jnp.float32)
        h = jnp.maximum(acc + b_c_ref[layer][None, :], 0.0)

    # ---- amax over L (per sample): single reshaped sublane reduction --------
    if tb == 1:
        m = jnp.max(h, axis=0, keepdims=True)                       # (1, 128)
    elif seq_len % 8 == 0:
        m = jnp.max(h.reshape(tb, seq_len, LAYER), axis=1)          # (tb, 128)
    else:
        # TODO(synk): sublane-unaligned L; fall back to per-sample slices.
        m = jnp.concatenate(
            [jnp.max(h[s * seq_len:(s + 1) * seq_len], axis=0, keepdims=True)
             for s in range(tb)], axis=0)

    # ---- Linear(128 -> 1) + sigmoid ------------------------------------------
    logit = jnp.sum(m * w_out_ref[...], axis=-1, keepdims=True) + b_out_ref[...]
    o_ref[...] = jax.nn.sigmoid(logit)[None].astype(o_ref.dtype)    # (1, tb, 1)


def model_forward(x_ncl, w_in, b_in, w_cs, b_cs, w_out, b_out,
                  *, tb=None, compute_dtype=jnp.bfloat16):
    """x_ncl: (B, Cin, L) in the PyTorch NCL convention. Returns (B, 1) f32."""
    B, cin, L = x_ncl.shape

    if tb is None:
        tb = _pick_tb(B, L)
    g = pl.cdiv(B, tb)
    b_pad = g * tb

    # NCL -> NLC so channels sit on the lane axis; build the 3 shifted taps
    # (with per-sample zero padding) as extra lane columns, pad the lane count
    # to 16 (zero columns match zero weight rows), pad batch to a tile multiple
    # and pack everything into one (B_pad*L, 16) row slab.
    kc = K * cin                                   # 9 real tap columns
    kc_pad = -(-kc // 16) * 16                     # -> 16
    x_nlc = jnp.transpose(x_ncl, (0, 2, 1)).astype(jnp.float32)      # (B, L, 3)
    x_prev = jnp.pad(x_nlc, ((0, 0), (1, 0), (0, 0)))[:, :L, :]      # x[l-1]
    x_next = jnp.pad(x_nlc, ((0, 0), (0, 1), (0, 0)))[:, 1:, :]      # x[l+1]
    x_taps = jnp.concatenate([x_prev, x_nlc, x_next], axis=-1)       # (B, L, 9)
    x_taps = jnp.pad(x_taps, ((0, b_pad - B), (0, 0), (0, kc_pad - kc)))
    x_rows = x_taps.reshape(b_pad * L, kc_pad).astype(compute_dtype)

    # Fuse the conv taps into single-matmul weights: row index = k*C + c
    # (k=0 pairs with x[l-1], matching the tap column order above).
    w_in_k = (jnp.transpose(w_in, (2, 1, 0))
              .reshape(kc, LAYER).astype(jnp.float32))
    w_in_k = jnp.pad(w_in_k, ((0, kc_pad - kc), (0, 0))).astype(compute_dtype)
    w_c_k = (jnp.transpose(w_cs, (0, 3, 2, 1))
             .reshape(N_MID, K * LAYER, LAYER).astype(compute_dtype))   # (4,384,128)
    b_in_k = b_in.reshape(1, LAYER).astype(jnp.float32)
    b_c_k = b_cs.astype(jnp.float32)
    w_out_k = w_out.reshape(1, LAYER).astype(jnp.float32)
    b_out_k = b_out.reshape(1, 1).astype(jnp.float32)

    kernel = functools.partial(cnn_kernel, tb=tb, seq_len=L)
    out = pl.pallas_call(
        kernel,
        out_shape=jax.ShapeDtypeStruct((g, tb, 1), jnp.float32),
        grid_spec=pltpu.PrefetchScalarGridSpec(
            num_scalar_prefetch=0,
            grid=(g,),
            in_specs=[
                pl.BlockSpec((tb * L, kc_pad), lambda i: (i, 0)),              # tap slab
                pl.BlockSpec((kc_pad, LAYER), lambda i: (0, 0)),               # w_in (fused)
                pl.BlockSpec((1, LAYER), lambda i: (0, 0)),                    # b_in
                pl.BlockSpec((N_MID, K * LAYER, LAYER), lambda i: (0, 0, 0)),  # mid weights
                pl.BlockSpec((N_MID, LAYER), lambda i: (0, 0)),                # mid biases
                pl.BlockSpec((1, LAYER), lambda i: (0, 0)),                    # linear weight
                pl.BlockSpec((1, 1), lambda i: (0, 0)),                        # linear bias
            ],
            out_specs=pl.BlockSpec((1, tb, 1), lambda i: (i, 0, 0)),
        ),
        compiler_params=pltpu.CompilerParams(
            dimension_semantics=("parallel",)),
    )(x_rows, w_in_k, b_in_k, w_c_k, b_c_k, w_out_k, b_out_k)
    return out.reshape(b_pad, 1)[:B]


# ---------------- pure-JAX reference (PyTorch semantics, NCL) ----------------
def _conv1d_ref(x, w, b):
    y = jax.lax.conv_general_dilated(
        x, w, window_strides=(1,), padding=((1, 1),),
        dimension_numbers=("NCH", "OIH", "NCH"))
    return y + b[None, :, None]


def ref_forward(x_ncl, w_in, b_in, w_cs, b_cs, w_out, b_out):
    h = _conv1d_ref(x_ncl, w_in, b_in)
    for i in range(N_MID):
        h = jax.nn.relu(_conv1d_ref(h, w_cs[i], b_cs[i]))
    m = jnp.max(h, axis=-1)                     # (B, 128)
    logit = m @ w_out.T + b_out                 # (B, 1)
    return jax.nn.sigmoid(logit)


if __name__ == "__main__":
    key = jax.random.PRNGKey(0)
    ks = jax.random.split(key, 8)

    CIN, L = 3, 16
    # deterministic parameters (PyTorch shape conventions)
    w_in = 0.2 * jax.random.normal(ks[1], (LAYER, CIN, K), dtype=jnp.float32)
    b_in = 0.1 * jax.random.normal(ks[2], (LAYER,), dtype=jnp.float32)
    w_cs = 0.05 * jax.random.normal(ks[3], (N_MID, LAYER, LAYER, K), dtype=jnp.float32)
    b_cs = 0.1 * jax.random.normal(ks[4], (N_MID, LAYER), dtype=jnp.float32)
    w_out = 0.1 * jax.random.normal(ks[5], (1, LAYER), dtype=jnp.float32)
    b_out = 0.1 * jax.random.normal(ks[6], (1,), dtype=jnp.float32)

    # f32 MXU path (tight tolerance): auto tb (single dense step, no padding)
    # plus a forced multi-step tiled case (B=10, tb=4 -> grid=3, batch pad 12).
    for bsz, tb_opt in ((2, None), (10, None), (10, 4)):
        x_ncl = jax.random.normal(ks[0], (bsz, CIN, L), dtype=jnp.float32)
        y = jax.block_until_ready(
            model_forward(x_ncl, w_in, b_in, w_cs, b_cs, w_out, b_out,
                          tb=tb_opt, compute_dtype=jnp.float32))
        y_ref = ref_forward(x_ncl, w_in, b_in, w_cs, b_cs, w_out, b_out)
        assert y.shape == (bsz, 1)
        assert jnp.allclose(y, y_ref, atol=1e-4, rtol=1e-4), (bsz, tb_opt, y, y_ref)

    # default path: bf16 MXU operands with f32 accumulation (all generations).
    x_ncl = jax.random.normal(ks[7], (10, CIN, L), dtype=jnp.float32)
    y_bf16 = jax.block_until_ready(
        model_forward(x_ncl, w_in, b_in, w_cs, b_cs, w_out, b_out))
    y_ref = ref_forward(x_ncl, w_in, b_in, w_cs, b_cs, w_out, b_out)
    assert y_bf16.shape == (10, 1)
    assert jnp.allclose(y_bf16, y_ref, atol=5e-2, rtol=5e-2), (y_bf16, y_ref)

    print("KERNEL_OK")
</pallas_src>

<mosaic_0001>
module attributes {stable_mosaic.version = 11 : i64} {
  func.func @cnn_kernel(%arg0: i32, %arg1: memref<32x16xf32, #tpu.memory_space<vmem>>, %arg2: memref<16x128xf32, #tpu.memory_space<vmem>>, %arg3: memref<1x128xf32, #tpu.memory_space<vmem>>, %arg4: memref<4x384x128xf32, #tpu.memory_space<vmem>>, %arg5: memref<4x128xf32, #tpu.memory_space<vmem>>, %arg6: memref<1x128xf32, #tpu.memory_space<vmem>>, %arg7: memref<1x1xf32, #tpu.memory_space<vmem>>, %arg8: memref<1x2x1xf32, #tpu.memory_space<vmem>>) attributes {dimension_semantics = [#tpu.dimension_semantics<parallel>], iteration_bounds = array<i64: 1>, scalar_prefetch = 0 : i64, scratch_operands = 0 : i64, tpu.core_type = #tpu.core_type<tc>, window_params = [{transform_indices = @transform_0, window_bounds = array<i64: 32, 16>}, {pipeline_mode = #tpu.pipeline_mode<synchronous>, transform_indices = @transform_1, window_bounds = array<i64: 16, 128>}, {pipeline_mode = #tpu.pipeline_mode<synchronous>, transform_indices = @transform_2, window_bounds = array<i64: 1, 128>}, {pipeline_mode = #tpu.pipeline_mode<synchronous>, transform_indices = @transform_3, window_bounds = array<i64: 4, 384, 128>}, {pipeline_mode = #tpu.pipeline_mode<synchronous>, transform_indices = @transform_4, window_bounds = array<i64: 4, 128>}, {pipeline_mode = #tpu.pipeline_mode<synchronous>, transform_indices = @transform_5, window_bounds = array<i64: 1, 128>}, {pipeline_mode = #tpu.pipeline_mode<synchronous>, transform_indices = @transform_6, window_bounds = array<i64: 1, 1>}, {transform_indices = @transform_7, window_bounds = array<i64: 1, 2, 1>}]} {
    %0 = tpu.iota {dimensions = array<i32: 0>} : vector<32x128xi32>
    %c16_i32 = arith.constant 16 : i32
    %c0_i32 = arith.constant 0 : i32
    %1 = arith.cmpi eq, %c16_i32, %c0_i32 : i32
    %c1_i32 = arith.constant 1 : i32
    %2 = arith.select %1, %c1_i32, %c16_i32 : i32
    %3 = vector.broadcast %2 : i32 to vector<32x128xi32>
    %4 = arith.remsi %0, %3 : vector<32x128xi32>
    %c0_i32_0 = arith.constant 0 : i32
    %5 = vector.broadcast %c0_i32_0 : i32 to vector<32x128xi32>
    %6 = arith.cmpi ne, %4, %5 : vector<32x128xi32>
    %c0_i32_1 = arith.constant 0 : i32
    %7 = vector.broadcast %c0_i32_1 : i32 to vector<32x128xi32>
    %8 = arith.cmpi slt, %4, %7 : vector<32x128xi32>
    %c0_i32_2 = arith.constant 0 : i32
    %9 = arith.cmpi slt, %2, %c0_i32_2 : i32
    %10 = vector.broadcast %9 : i1 to vector<32x128xi1>
    %11 = vector.broadcast %10 : vector<32x128xi1> to vector<32x128xi1>
    %12 = arith.xori %8, %11 : vector<32x128xi1>
    %13 = arith.andi %12, %6 : vector<32x128xi1>
    %14 = vector.broadcast %2 : i32 to vector<32x128xi32>
    %15 = arith.addi %4, %14 : vector<32x128xi32>
    %16 = arith.select %13, %15, %4 : vector<32x128xi1>, vector<32x128xi32>
    %c0_i32_3 = arith.constant 0 : i32
    %17 = vector.broadcast %c0_i32_3 : i32 to vector<32x128xi32>
    %18 = arith.cmpi ne, %16, %17 : vector<32x128xi32>
    %19 = arith.extui %18 : vector<32x128xi1> to vector<32x128xi32>
    %20 = arith.sitofp %19 : vector<32x128xi32> to vector<32x128xf32>
    %c15_i32 = arith.constant 15 : i32
    %21 = vector.broadcast %c15_i32 : i32 to vector<32x128xi32>
    %22 = arith.cmpi ne, %16, %21 : vector<32x128xi32>
    %23 = arith.extui %22 : vector<32x128xi1> to vector<32x128xi32>
    %24 = arith.sitofp %23 : vector<32x128xi32> to vector<32x128xf32>
    %c0 = arith.constant 0 : index
    %c0_4 = arith.constant 0 : index
    %25 = vector.load %arg1[%c0, %c0_4] : memref<32x16xf32, #tpu.memory_space<vmem>>, vector<32x16xf32>
    %c0_5 = arith.constant 0 : index
    %c0_6 = arith.constant 0 : index
    %26 = vector.load %arg2[%c0_5, %c0_6] : memref<16x128xf32, #tpu.memory_space<vmem>>, vector<16x128xf32>
    %cst = arith.constant dense<0.000000e+00> : vector<32x128xf32>
    %27 = tpu.matmul %25, %26, %cst {dimension_numbers = #tpu.dot_dimension_numbers<[1], [0], [0], [1], [0, 0, 1, 1], [], []>} : vector<32x16xf32>, vector<16x128xf32>, vector<32x128xf32> -> vector<32x128xf32>
    %c0_7 = arith.constant 0 : index
    %c0_8 = arith.constant 0 : index
    %28 = vector.load %arg3[%c0_7, %c0_8] : memref<1x128xf32, #tpu.memory_space<vmem>>, vector<1x128xf32>
    %29 = vector.broadcast %28 : vector<1x128xf32> to vector<32x128xf32>
    %30 = arith.addf %27, %29 : vector<32x128xf32>
    %c1_i32_9 = arith.constant 1 : i32
    %31 = tpu.dynamic_rotate %30 by %c1_i32_9 dim 0 : vector<32x128xf32>, i32 -> vector<32x128xf32>
    %32 = arith.mulf %20, %31 : vector<32x128xf32>
    %c31_i32 = arith.constant 31 : i32
    %33 = tpu.dynamic_rotate %30 by %c31_i32 dim 0 : vector<32x128xf32>, i32 -> vector<32x128xf32>
    %34 = arith.mulf %24, %33 : vector<32x128xf32>
    %35 = tpu.concatenate %32, %30, %34 in 1 : vector<32x128xf32>, vector<32x128xf32>, vector<32x128xf32> -> vector<32x384xf32>
    %c0_10 = arith.constant 0 : index
    %c0_11 = arith.constant 0 : index
    %c0_12 = arith.constant 0 : index
    %36 = vector.load %arg4[%c0_10, %c0_11, %c0_12] : memref<4x384x128xf32, #tpu.memory_space<vmem>>, vector<1x384x128xf32>
    %37 = vector.shape_cast %36 : vector<1x384x128xf32> to vector<384x128xf32>
    %cst_13 = arith.constant dense<0.000000e+00> : vector<32x128xf32>
    %38 = tpu.matmul %35, %37, %cst_13 {dimension_numbers = #tpu.dot_dimension_numbers<[1], [0], [0], [1], [0, 0, 1, 1], [], []>} : vector<32x384xf32>, vector<384x128xf32>, vector<32x128xf32> -> vector<32x128xf32>
    %c0_14 = arith.constant 0 : index
    %c0_15 = arith.constant 0 : index
    %39 = vector.load %arg5[%c0_14, %c0_15] : memref<4x128xf32, #tpu.memory_space<vmem>>, vector<1x128xf32>
    %40 = vector.shape_cast %39 : vector<1x128xf32> to vector<128xf32>
    %41 = vector.shape_cast %40 : vector<128xf32> to vector<1x128xf32>
    %42 = vector.broadcast %41 : vector<1x128xf32> to vector<32x128xf32>
    %43 = arith.addf %38, %42 : vector<32x128xf32>
    %cst_16 = arith.constant 0.000000e+00 : f32
    %44 = vector.broadcast %cst_16 : f32 to vector<32x128xf32>
    %45 = arith.maximumf %43, %44 : vector<32x128xf32>
    %c1_i32_17 = arith.constant 1 : i32
    %46 = tpu.dynamic_rotate %45 by %c1_i32_17 dim 0 : vector<32x128xf32>, i32 -> vector<32x128xf32>
    %47 = arith.mulf %20, %46 : vector<32x128xf32>
    %c31_i32_18 = arith.constant 31 : i32
    %48 = tpu.dynamic_rotate %45 by %c31_i32_18 dim 0 : vector<32x128xf32>, i32 -> vector<32x128xf32>
    %49 = arith.mulf %24, %48 : vector<32x128xf32>
    %50 = tpu.concatenate %47, %45, %49 in 1 : vector<32x128xf32>, vector<32x128xf32>, vector<32x128xf32> -> vector<32x384xf32>
    %c1 = arith.constant 1 : index
    %c0_19 = arith.constant 0 : index
    %c0_20 = arith.constant 0 : index
    %51 = vector.load %arg4[%c1, %c0_19, %c0_20] : memref<4x384x128xf32, #tpu.memory_space<vmem>>, vector<1x384x128xf32>
    %52 = vector.shape_cast %51 : vector<1x384x128xf32> to vector<384x128xf32>
    %cst_21 = arith.constant dense<0.000000e+00> : vector<32x128xf32>
    %53 = tpu.matmul %50, %52, %cst_21 {dimension_numbers = #tpu.dot_dimension_numbers<[1], [0], [0], [1], [0, 0, 1, 1], [], []>} : vector<32x384xf32>, vector<384x128xf32>, vector<32x128xf32> -> vector<32x128xf32>
    %c1_22 = arith.constant 1 : index
    %c0_23 = arith.constant 0 : index
    %54 = vector.load %arg5[%c1_22, %c0_23] : memref<4x128xf32, #tpu.memory_space<vmem>>, vector<1x128xf32>
    %55 = vector.shape_cast %54 : vector<1x128xf32> to vector<128xf32>
    %56 = vector.shape_cast %55 : vector<128xf32> to vector<1x128xf32>
    %57 = vector.broadcast %56 : vector<1x128xf32> to vector<32x128xf32>
    %58 = arith.addf %53, %57 : vector<32x128xf32>
    %cst_24 = arith.constant 0.000000e+00 : f32
    %59 = vector.broadcast %cst_24 : f32 to vector<32x128xf32>
    %60 = arith.maximumf %58, %59 : vector<32x128xf32>
    %c1_i32_25 = arith.constant 1 : i32
    %61 = tpu.dynamic_rotate %60 by %c1_i32_25 dim 0 : vector<32x128xf32>, i32 -> vector<32x128xf32>
    %62 = arith.mulf %20, %61 : vector<32x128xf32>
    %c31_i32_26 = arith.constant 31 : i32
    %63 = tpu.dynamic_rotate %60 by %c31_i32_26 dim 0 : vector<32x128xf32>, i32 -> vector<32x128xf32>
    %64 = arith.mulf %24, %63 : vector<32x128xf32>
    %65 = tpu.concatenate %62, %60, %64 in 1 : vector<32x128xf32>, vector<32x128xf32>, vector<32x128xf32> -> vector<32x384xf32>
    %c2 = arith.constant 2 : index
    %c0_27 = arith.constant 0 : index
    %c0_28 = arith.constant 0 : index
    %66 = vector.load %arg4[%c2, %c0_27, %c0_28] : memref<4x384x128xf32, #tpu.memory_space<vmem>>, vector<1x384x128xf32>
    %67 = vector.shape_cast %66 : vector<1x384x128xf32> to vector<384x128xf32>
    %cst_29 = arith.constant dense<0.000000e+00> : vector<32x128xf32>
    %68 = tpu.matmul %65, %67, %cst_29 {dimension_numbers = #tpu.dot_dimension_numbers<[1], [0], [0], [1], [0, 0, 1, 1], [], []>} : vector<32x384xf32>, vector<384x128xf32>, vector<32x128xf32> -> vector<32x128xf32>
    %c2_30 = arith.constant 2 : index
    %c0_31 = arith.constant 0 : index
    %69 = vector.load %arg5[%c2_30, %c0_31] : memref<4x128xf32, #tpu.memory_space<vmem>>, vector<1x128xf32>
    %70 = vector.shape_cast %69 : vector<1x128xf32> to vector<128xf32>
    %71 = vector.shape_cast %70 : vector<128xf32> to vector<1x128xf32>
    %72 = vector.broadcast %71 : vector<1x128xf32> to vector<32x128xf32>
    %73 = arith.addf %68, %72 : vector<32x128xf32>
    %cst_32 = arith.constant 0.000000e+00 : f32
    %74 = vector.broadcast %cst_32 : f32 to vector<32x128xf32>
    %75 = arith.maximumf %73, %74 : vector<32x128xf32>
    %c1_i32_33 = arith.constant 1 : i32
    %76 = tpu.dynamic_rotate %75 by %c1_i32_33 dim 0 : vector<32x128xf32>, i32 -> vector<32x128xf32>
    %77 = arith.mulf %20, %76 : vector<32x128xf32>
    %c31_i32_34 = arith.constant 31 : i32
    %78 = tpu.dynamic_rotate %75 by %c31_i32_34 dim 0 : vector<32x128xf32>, i32 -> vector<32x128xf32>
    %79 = arith.mulf %24, %78 : vector<32x128xf32>
    %80 = tpu.concatenate %77, %75, %79 in 1 : vector<32x128xf32>, vector<32x128xf32>, vector<32x128xf32> -> vector<32x384xf32>
    %c3 = arith.constant 3 : index
    %c0_35 = arith.constant 0 : index
    %c0_36 = arith.constant 0 : index
    %81 = vector.load %arg4[%c3, %c0_35, %c0_36] : memref<4x384x128xf32, #tpu.memory_space<vmem>>, vector<1x384x128xf32>
    %82 = vector.shape_cast %81 : vector<1x384x128xf32> to vector<384x128xf32>
    %cst_37 = arith.constant dense<0.000000e+00> : vector<32x128xf32>
    %83 = tpu.matmul %80, %82, %cst_37 {dimension_numbers = #tpu.dot_dimension_numbers<[1], [0], [0], [1], [0, 0, 1, 1], [], []>} : vector<32x384xf32>, vector<384x128xf32>, vector<32x128xf32> -> vector<32x128xf32>
    %c3_38 = arith.constant 3 : index
    %c0_39 = arith.constant 0 : index
    %84 = vector.load %arg5[%c3_38, %c0_39] : memref<4x128xf32, #tpu.memory_space<vmem>>, vector<1x128xf32>
    %85 = vector.shape_cast %84 : vector<1x128xf32> to vector<128xf32>
    %86 = vector.shape_cast %85 : vector<128xf32> to vector<1x128xf32>
    %87 = vector.broadcast %86 : vector<1x128xf32> to vector<32x128xf32>
    %88 = arith.addf %83, %87 : vector<32x128xf32>
    %cst_40 = arith.constant 0.000000e+00 : f32
    %89 = vector.broadcast %cst_40 : f32 to vector<32x128xf32>
    %90 = arith.maximumf %88, %89 : vector<32x128xf32>
    %91 = vector.shape_cast %90 : vector<32x128xf32> to vector<2x16x128xf32>
    %cst_41 = arith.constant dense<0xFF800000> : vector<2x128xf32>
    %92 = vector.multi_reduction <maximumf>, %91, %cst_41 [1] : vector<2x16x128xf32> to vector<2x128xf32>
    %c0_42 = arith.constant 0 : index
    %c0_43 = arith.constant 0 : index
    %93 = vector.load %arg6[%c0_42, %c0_43] : memref<1x128xf32, #tpu.memory_space<vmem>>, vector<1x128xf32>
    %94 = vector.broadcast %93 : vector<1x128xf32> to vector<2x128xf32>
    %95 = arith.mulf %92, %94 : vector<2x128xf32>
    %cst_44 = arith.constant dense<0.000000e+00> : vector<2xf32>
    %96 = vector.multi_reduction <add>, %95, %cst_44 [1] : vector<2x128xf32> to vector<2xf32>
    %97 = vector.shape_cast %96 : vector<2xf32> to vector<2x1xf32>
    %c0_45 = arith.constant 0 : index
    %c0_46 = arith.constant 0 : index
    %98 = vector.load %arg7[%c0_45, %c0_46] : memref<1x1xf32, #tpu.memory_space<vmem>>, vector<1x1xf32>
    %99 = vector.broadcast %98 : vector<1x1xf32> to vector<2x1xf32>
    %100 = arith.addf %97, %99 : vector<2x1xf32>
    %101 = arith.negf %100 : vector<2x1xf32>
    %102 = math.exp %101 : vector<2x1xf32>
    %cst_47 = arith.constant 1.000000e+00 : f32
    %103 = vector.broadcast %cst_47 : f32 to vector<2x1xf32>
    %104 = arith.addf %103, %102 : vector<2x1xf32>
    %105 = arith.divf %103, %104 : vector<2x1xf32>
    %106 = vector.shape_cast %105 : vector<2x1xf32> to vector<1x2x1xf32>
    %c0_48 = arith.constant 0 : index
    %c0_49 = arith.constant 0 : index
    %c0_50 = arith.constant 0 : index
    %107 = vector.load %arg8[%c0_48, %c0_49, %c0_50] : memref<1x2x1xf32, #tpu.memory_space<vmem>>, vector<1x2x1xf32>
    tpu.vector_store %arg8[%c0_48, %c0_49, %c0_50], %106 {strides = array<i32>} : memref<1x2x1xf32, #tpu.memory_space<vmem>>, vector<1x2x1xf32>,
    return
  }
  func.func @transform_0(%arg0: i32) -> (i32, i32) {
    %c0_i32 = arith.constant 0 : i32
    %c0_i32_0 = arith.constant 0 : i32
    return %arg0, %c0_i32 : i32, i32
  }
  func.func @transform_1(%arg0: i32) -> (i32, i32) {
    %c0_i32 = arith.constant 0 : i32
    %c0_i32_0 = arith.constant 0 : i32
    %c0_i32_1 = arith.constant 0 : i32
    return %c0_i32, %c0_i32_0 : i32, i32
  }
  func.func @transform_2(%arg0: i32) -> (i32, i32) {
    %c0_i32 = arith.constant 0 : i32
    %c0_i32_0 = arith.constant 0 : i32
    %c0_i32_1 = arith.constant 0 : i32
    return %c0_i32, %c0_i32_0 : i32, i32
  }
  func.func @transform_3(%arg0: i32) -> (i32, i32, i32) {
    %c0_i32 = arith.constant 0 : i32
    %c0_i32_0 = arith.constant 0 : i32
    %c0_i32_1 = arith.constant 0 : i32
    %c0_i32_2 = arith.constant 0 : i32
    return %c0_i32, %c0_i32_0, %c0_i32_1 : i32, i32, i32
  }
  func.func @transform_4(%arg0: i32) -> (i32, i32) {
    %c0_i32 = arith.constant 0 : i32
    %c0_i32_0 = arith.constant 0 : i32
    %c0_i32_1 = arith.constant 0 : i32
    return %c0_i32, %c0_i32_0 : i32, i32
  }
  func.func @transform_5(%arg0: i32) -> (i32, i32) {
    %c0_i32 = arith.constant 0 : i32
    %c0_i32_0 = arith.constant 0 : i32
    %c0_i32_1 = arith.constant 0 : i32
    return %c0_i32, %c0_i32_0 : i32, i32
  }
  func.func @transform_6(%arg0: i32) -> (i32, i32) {
    %c0_i32 = arith.constant 0 : i32
    %c0_i32_0 = arith.constant 0 : i32
    %c0_i32_1 = arith.constant 0 : i32
    return %c0_i32, %c0_i32_0 : i32, i32
  }
  func.func @transform_7(%arg0: i32) -> (i32, i32, i32) {
    %c0_i32 = arith.constant 0 : i32
    %c0_i32_0 = arith.constant 0 : i32
    %c0_i32_1 = arith.constant 0 : i32
    return %arg0, %c0_i32, %c0_i32_0 : i32, i32, i32
  }
}

</mosaic_0001>

<llo_original>
// kernel: tpu_custom_call.1
$region0: #{tpu_custom_call.1}
  #allocation0 [shape = 'u32[]', space=smem, size = 0x4, offset = 0x4, fixed_abs, tag = 'smem constant byte address 0x4 - core index']
  #allocation1 [shape = 'u32[144,128]{1,0:T(1,128)}', space=vmem, size = 0x12000, scoped, tag = 'internal scratch']
  #allocation2 [shape = 'f32[1,1]{1,0:T(1,128)S(1)}', space=vmem, size = 0x200, scoped, tag = 'scoped memory for tpu_custom_call.1']
  %s0 = inlined_call_operand.vmem [shape: f32[32,16], index: 0, kind: input, shape index: {}]
  %s1 = inlined_call_operand.vmem [shape: f32[16,128], index: 1, kind: input, shape index: {}]
  %s2 = inlined_call_operand.vmem [shape: f32[1,128], index: 2, kind: input, shape index: {}]
  %s3 = inlined_call_operand.hbm [shape: f32[4,384,128], index: 3, kind: input, shape index: {}]
  %s4 = inlined_call_operand.vmem [shape: f32[4,128], index: 4, kind: input, shape index: {}]
  %s5 = inlined_call_operand.vmem [shape: f32[1,128], index: 5, kind: input, shape index: {}]
  %s6 = inlined_call_operand.<no memory space> [shape: f32[1,1], index: 6, kind: input, shape index: {}]
  %s7 = inlined_call_operand.vmem [shape: f32[1,2,1], index: 7, kind: output, shape index: {}]
  %s8 = sld [smem:[#allocation0]]
  $region42: #{tpu_custom_call.1} parent=0
    _
  %s10 = ssub.s32 1, %s8
  %s11 = scalar_select 0, %s10, %s8
  %v12 = vstv %s6
  %13 = vst [vmem:[#allocation2] sm:$0x1] %v12
  $region1: #{tpu_custom_call.1} parent=0
    #allocation3 [shape = 'u8[786432]{0}', space=vmem, size = 0xc0000, scoped, tag = 'input window, operand 3, single buffered']
    #allocation4 [shape = 's32[1]{0}', space=sflag, size = 0x4, scoped, tag = 'scoped memory for tpu_custom_call.1']
    %14 = vsyncpa [#allocation4], 0
    // Predicated region
    $region2: #{tpu_custom_call.1} parent=1 // pred_check
      _
    $region3: #{tpu_custom_call.1} parent=1 // pred_check_branch
      %16 = sbr.rel (0) target = $region5
    $region4: #{tpu_custom_call.1} parent=1 // pred_region
      _
    $region5: #{tpu_custom_call.1} parent=1 // pred_fallthru
      _
    // Predicated region
    $region6: #{tpu_custom_call.1} parent=1 // pred_check
      _
    $region7: #{tpu_custom_call.1} parent=1 // pred_check_branch
      %18 = sbr.rel (0) target = $region9
    $region8: #{tpu_custom_call.1} parent=1 // pred_region
      _
    $region9: #{tpu_custom_call.1} parent=1 // pred_fallthru
      _
    // Predicated region
    $region10: #{tpu_custom_call.1} parent=1 // pred_check
      _
    $region11: #{tpu_custom_call.1} parent=1 // pred_check_branch
      %20 = sbr.rel (0) target = $region13
    $region12: #{tpu_custom_call.1} parent=1 // pred_region
      _
    $region13: #{tpu_custom_call.1} parent=1 // pred_fallthru
      _
    // Predicated region
    $region14: #{tpu_custom_call.1} parent=1 // pred_check
      _
    $region15: #{tpu_custom_call.1} parent=1 // pred_check_branch
      %22 = sbr.rel (0) target = $region17
    $region16: #{tpu_custom_call.1} parent=1 // pred_region
      %s24 = ssub.s32 24576, 24576
      %25 = vsyncadd [#allocation4], %s24
      %s26 = sshll.u32 [#allocation3], 4
      %s27 = int_to_ptr.vmem [resolvable:$true] %s26
      %32 = dma.hbm_to_vmem [thread:$0]  %s3, 24576, %s27, [#allocation4], 128, 128, 8
    $region17: #{tpu_custom_call.1} parent=1 // pred_fallthru
      _
    // Predicated region
    $region18: #{tpu_custom_call.1} parent=1 // pred_check
      _
    $region19: #{tpu_custom_call.1} parent=1 // pred_check_branch
      %34 = sbr.rel (0) target = $region21
    $region20: #{tpu_custom_call.1} parent=1 // pred_region
      _
    $region21: #{tpu_custom_call.1} parent=1 // pred_fallthru
      _
    // Predicated region
    $region22: #{tpu_custom_call.1} parent=1 // pred_check
      _
    $region23: #{tpu_custom_call.1} parent=1 // pred_check_branch
      %36 = sbr.rel (0) target = $region25
    $region24: #{tpu_custom_call.1} parent=1 // pred_region
      _
    $region25: #{tpu_custom_call.1} parent=1 // pred_fallthru
      _
    // Predicated region
    $region26: #{tpu_custom_call.1} parent=1 // pred_check
      _
    $region27: #{tpu_custom_call.1} parent=1 // pred_check_branch
      %38 = sbr.rel (0) target = $region29
    $region28: #{tpu_custom_call.1} parent=1 // pred_region
      _
    $region29: #{tpu_custom_call.1} parent=1 // pred_fallthru
      _
    // Predicated region
    $region30: #{tpu_custom_call.1} parent=1 // pred_check
      _
    $region31: #{tpu_custom_call.1} parent=1 // pred_check_branch
      %40 = sbr.rel (0) target = $region33
    $region32: #{tpu_custom_call.1} parent=1 // pred_region
      %41 = dma.done [#allocation4], 24576
    $region33: #{tpu_custom_call.1} parent=1 // pred_fallthru
      _
    %v42 = vlaneseq
    %v43 = vshrl.u32 %v42, 7
    %v44 = vadd.s32 %v43, 8
    %v45 = vadd.s32 %v43, 16
    %v46 = vadd.s32 %v43, 24
    %vm47 = vcmp.lt.s32.totalorder %v43, 0
    %v48 = vsub.s32 0, %v43
    %v49 = vsel %vm47, %v48, %v43
    %v50 = vshrl.u32 %v49, 4
    %v51 = vand.u32 %v49, 15
    %v52 = vsub.s32 0, %v51
    %v53 = vsel %vm47, %v52, %v51
    %vm54 = vcmp.lt.s32.totalorder %v44, 0
    %v55 = vsub.s32 0, %v44
    %v56 = vsel %vm54, %v55, %v44
    %v57 = vshrl.u32 %v56, 4
    %v58 = vand.u32 %v56, 15
    %v59 = vsub.s32 0, %v58
    %v60 = vsel %vm54, %v59, %v58
    %vm61 = vcmp.lt.s32.totalorder %v45, 0
    %v62 = vsub.s32 0, %v45
    %v63 = vsel %vm61, %v62, %v45
    %v64 = vshrl.u32 %v63, 4
    %v65 = vand.u32 %v63, 15
    %v66 = vsub.s32 0, %v65
    %v67 = vsel %vm61, %v66, %v65
    %vm68 = vcmp.lt.s32.totalorder %v46, 0
    %v69 = vsub.s32 0, %v46
    %v70 = vsel %vm68, %v69, %v46
    %v71 = vshrl.u32 %v70, 4
    %v72 = vand.u32 %v70, 15
    %v73 = vsub.s32 0, %v72
    %v74 = vsel %vm68, %v73, %v72
    %vm75 = vcmp.ne.s32.totalorder %v53, 0
    %vm76 = vcmp.ne.s32.totalorder %v60, 0
    %vm77 = vcmp.ne.s32.totalorder %v67, 0
    %vm78 = vcmp.ne.s32.totalorder %v74, 0
    %vm79 = vcmp.lt.s32.totalorder %v53, 0
    %vm80 = vcmp.lt.s32.totalorder %v60, 0
    %vm81 = vcmp.lt.s32.totalorder %v67, 0
    %vm82 = vcmp.lt.s32.totalorder %v74, 0
    %vm83 = vmand %vm79, %vm75
    %vm84 = vmand %vm80, %vm76
    %vm85 = vmand %vm81, %vm77
    %vm86 = vmand %vm82, %vm78
    %v87 = vadd.s32 %v53, 16
    %v88 = vadd.s32 %v60, 16
    %v89 = vadd.s32 %v67, 16
    %v90 = vadd.s32 %v74, 16
    %v91 = vsel %vm83, %v87, %v53
    %v92 = vsel %vm84, %v88, %v60
    %v93 = vsel %vm85, %v89, %v67
    %v94 = vsel %vm86, %v90, %v74
    %vm95 = vcmp.ne.s32.totalorder %v91, 0
    %vm96 = vcmp.ne.s32.totalorder %v92, 0
    %vm97 = vcmp.ne.s32.totalorder %v93, 0
    %vm98 = vcmp.ne.s32.totalorder %v94, 0
    %v99 = vsel %vm95, 1, 0
    %v100 = vsel %vm96, 1, 0
    %v101 = vsel %vm97, 1, 0
    %v102 = vsel %vm98, 1, 0
    %v103 = vcvt.s32.f32 %v99
    %v104 = vcvt.s32.f32 %v100
    %v105 = vcvt.s32.f32 %v101
    %v106 = vcvt.s32.f32 %v102
    %vm107 = vcmp.ne.s32.totalorder %v91, 15
    %vm108 = vcmp.ne.s32.totalorder %v92, 15
    %vm109 = vcmp.ne.s32.totalorder %v93, 15
    %vm110 = vcmp.ne.s32.totalorder %v94, 15
    %v111 = vsel %vm107, 1, 0
    %v112 = vsel %vm108, 1, 0
    %v113 = vsel %vm109, 1, 0
    %v114 = vsel %vm110, 1, 0
    %v115 = vcvt.s32.f32 %v111
    %v116 = vcvt.s32.f32 %v112
    %v117 = vcvt.s32.f32 %v113
    %v118 = vcvt.s32.f32 %v114
    %v119 = vld [vmem:[%s0] sm:$0xff]
    %v120 = vld [vmem:[%s0 + $0x8] sm:$0xff]
    %v121 = vld [vmem:[%s0 + $0x10] sm:$0xff]
    %v122 = vld [vmem:[%s0 + $0x18] sm:$0xff]
    %v123 = vld [vmem:[%s1] sm:$0xff]
    %v124 = vld [vmem:[%s1 + $0x8] sm:$0xff]
    %v125 = vld [vmem:[%s2] sm:$0x1]
    %v127 = vlaneseq
    %v128 = vshrl.u32 %v127, 7
    %v129 = vsub.s32 0, %v128
    %v130 = vrot.slane %v125, %v129
    %vm132 = vcmask 130048
    %v134 = vsel %vm132, %v119, 0
    %v137 = vsel %vm132, %v120, 0
    %v140 = vsel %vm132, %v121, 0
    %v143 = vsel %vm132, %v122, 0
    %145 = vmatprep.subr.mxu0 0.0
    %146 = vmatpush1.msra.mxu0 %v123
    %147 = vmatprep.subr.mxu0 0.0
    %148 = vmatpush1.msra.mxu0 %v124
    %149 = vmatprep.subr.mxu0 0.0
    %150 = vmatpush1.msra.mxu0 0.0
    %151 = vmatprep.subr.mxu0 0.0
    %152 = vmatpush1.msra.mxu0 0.0
    %153 = vmatprep.subr.mxu0 0.0
    %154 = vmatpush1.msra.mxu0 0.0
    %155 = vmatprep.subr.mxu0 0.0
    %156 = vmatpush1.msra.mxu0 0.0
    %157 = vmatprep.subr.mxu0 0.0
    %158 = vmatpush1.msra.mxu0 0.0
    %159 = vmatprep.subr.mxu0 0.0
    %160 = vmatpush1.msra.mxu0 0.0
    %161 = vmatprep.subr.mxu0 0.0
    %162 = vmatpush1.msra.mxu0 0.0
    %163 = vmatprep.subr.mxu0 0.0
    %164 = vmatpush1.msra.mxu0 0.0
    %165 = vmatprep.subr.mxu0 0.0
    %166 = vmatpush1.msra.mxu0 0.0
    %167 = vmatprep.subr.mxu0 0.0
    %168 = vmatpush1.msra.mxu0 0.0
    %169 = vmatprep.subr.mxu0 0.0
    %170 = vmatpush1.msra.mxu0 0.0
    %171 = vmatprep.subr.mxu0 0.0
    %172 = vmatpush1.msra.mxu0 0.0
    %173 = vmatprep.subr.mxu0 0.0
    %174 = vmatpush1.msra.mxu0 0.0
    %175 = vmatprep.subr.mxu0 0.0
    %176 = vmatpush1.msra.mxu0 0.0
    %177 = vmatprep.subr.mxu0 0.0
    %178 = vmatpush1.msra.mxu0 0.0
    %179 = vmatprep.subr.mxu0 0.0
    %180 = vmatpush1.msra.mxu0 0.0
    %181 = vmatprep.subr.mxu0 0.0
    %182 = vmatpush1.msra.mxu0 0.0
    %183 = vmatprep.subr.mxu0 0.0
    %184 = vmatpush1.msra.mxu0 0.0
    %185 = vmatprep.subr.mxu0 0.0
    %186 = vmatpush1.msra.mxu0 0.0
    %187 = vmatprep.subr.mxu0 0.0
    %188 = vmatpush1.msra.mxu0 0.0
    %189 = vmatprep.subr.mxu0 0.0
    %190 = vmatpush1.msra.mxu0 0.0
    %191 = vmatprep.subr.mxu0 0.0
    %192 = vmatpush1.msra.mxu0 0.0
    %193 = vmatprep.subr.mxu0 0.0
    %194 = vmatpush1.msra.mxu0 0.0
    %195 = vmatprep.subr.mxu0 0.0
    %196 = vmatpush1.msra.mxu0 0.0
    %197 = vmatprep.subr.mxu0 0.0
    %198 = vmatpush1.msra.mxu0 0.0
    %199 = vmatprep.subr.mxu0 0.0
    %200 = vmatpush1.msra.mxu0 0.0
    %201 = vmatprep.subr.mxu0 0.0
    %202 = vmatpush1.msra.mxu0 0.0
    %203 = vmatprep.subr.mxu0 0.0
    %204 = vmatpush1.msra.mxu0 0.0
    %205 = vmatprep.subr.mxu0 0.0
    %206 = vmatpush1.msra.mxu0 0.0
    %207 = vmatprep.subr.mxu0 0.0
    %208 = vmatpush1.msra.mxu0 0.0
    %209 = vmatprep.mubr.f32.mxu0 0.0
    %210 = vmatmul.mubr.f32.gmra.mrb[0].mxu0 %v134
    %v211 = vpop.f32.mrb[0].mxu0
    %v212 = vadd.f32 %v130, %v211
    %v213 = vpop.f32.mrb[0].mxu0
    %214 = vmatprep.mubr.f32.mxu0 0.0
    %215 = vmatmul.mubr.f32.gmra.mrb[0].mxu0 %v137
    %v216 = vpop.f32.mrb[0].mxu0
    %v217 = vadd.f32 %v130, %v216
    %v218 = vpop.f32.mrb[0].mxu0
    %219 = vmatprep.mubr.f32.mxu0 0.0
    %220 = vmatmul.mubr.f32.gmra.mrb[0].mxu0 %v140
    %v221 = vpop.f32.mrb[0].mxu0
    %v222 = vadd.f32 %v130, %v221
    %v223 = vpop.f32.mrb[0].mxu0
    %224 = vmatprep.mubr.f32.mxu0 0.0
    %225 = vmatmul.mubr.f32.gmra.mrb[0].mxu0 %v143
    %v226 = vpop.f32.mrb[0].mxu0
    %v227 = vadd.f32 %v130, %v226
    %v228 = vpop.f32.mrb[0].mxu0
    %229 = vdwg.mxu0
    %v230 = vrot.slane %v212, 7
    %v231 = vrot.slane %v217, 7
    %v232 = vrot.slane %v222, 7
    %v233 = vrot.slane %v227, 7
    %vm234 = vcmp.lt.s32.totalorder %v43, 1
    %v235 = vsel %vm234, %v232, %v233
    %v236 = vsel %vm234, %v231, %v232
    %v237 = vsel %vm234, %v230, %v231
    %v238 = vsel %vm234, %v233, %v230
    %v239 = vmul.f32 %v103, %v238
    %v240 = vmul.f32 %v104, %v237
    %v241 = vmul.f32 %v105, %v236
    %v242 = vmul.f32 %v106, %v235
    %v243 = vrot.slane %v212, 1
    %v244 = vrot.slane %v217, 1
    %v245 = vrot.slane %v222, 1
    %v246 = vrot.slane %v227, 1
    %vm247 = vcmp.lt.s32.totalorder %v43, 7
    %v248 = vsel %vm247, %v245, %v246
    %v249 = vsel %vm247, %v244, %v245
    %v250 = vsel %vm247, %v243, %v244
    %v251 = vsel %vm247, %v246, %v243
    %v252 = vmul.f32 %v115, %v250
    %v253 = vmul.f32 %v116, %v249
    %v254 = vmul.f32 %v117, %v248
    %v255 = vmul.f32 %v118, %v251
    %v256 = vld [vmem:[#allocation3] sm:$0xff]
    %v257 = vld [vmem:[#allocation3 + $0x8] sm:$0xff]
    %v258 = vld [vmem:[#allocation3 + $0x10] sm:$0xff]
    %v259 = vld [vmem:[#allocation3 + $0x18] sm:$0xff]
    %v260 = vld [vmem:[#allocation3 + $0x20] sm:$0xff]
    %v261 = vld [vmem:[#allocation3 + $0x28] sm:$0xff]
    %v262 = vld [vmem:[#allocation3 + $0x30] sm:$0xff]
    %v263 = vld [vmem:[#allocation3 + $0x38] sm:$0xff]
    %v264 = vld [vmem:[#allocation3 + $0x40] sm:$0xff]
    %v265 = vld [vmem:[#allocation3 + $0x48] sm:$0xff]
    %v266 = vld [vmem:[#allocation3 + $0x50] sm:$0xff]
    %v267 = vld [vmem:[#allocation3 + $0x58] sm:$0xff]
    %v268 = vld [vmem:[#allocation3 + $0x60] sm:$0xff]
    %v269 = vld [vmem:[#allocation3 + $0x68] sm:$0xff]
    %v270 = vld [vmem:[#allocation3 + $0x70] sm:$0xff]
    %v271 = vld [vmem:[#allocation3 + $0x78] sm:$0xff]
    %v272 = vld [vmem:[#allocation3 + $0x80] sm:$0xff]
    %v273 = vld [vmem:[#allocation3 + $0x88] sm:$0xff]
    %v274 = vld [vmem:[#allocation3 + $0x90] sm:$0xff]
    %v275 = vld [vmem:[#allocation3 + $0x98] sm:$0xff]
    %v276 = vld [vmem:[#allocation3 + $0xa0] sm:$0xff]
    %v277 = vld [vmem:[#allocation3 + $0xa8] sm:$0xff]
    %v278 = vld [vmem:[#allocation3 + $0xb0] sm:$0xff]
    %v279 = vld [vmem:[#allocation3 + $0xb8] sm:$0xff]
    %v280 = vld [vmem:[#allocation3 + $0xc0] sm:$0xff]
    %v281 = vld [vmem:[#allocation3 + $0xc8] sm:$0xff]
    %v282 = vld [vmem:[#allocation3 + $0xd0] sm:$0xff]
    %v283 = vld [vmem:[#allocation3 + $0xd8] sm:$0xff]
    %v284 = vld [vmem:[#allocation3 + $0xe0] sm:$0xff]
    %v285 = vld [vmem:[#allocation3 + $0xe8] sm:$0xff]
    %v286 = vld [vmem:[#allocation3 + $0xf0] sm:$0xff]
    %v287 = vld [vmem:[#allocation3 + $0xf8] sm:$0xff]
    %v288 = vld [vmem:[#allocation3 + $0x100] sm:$0xff]
    %v289 = vld [vmem:[#allocation3 + $0x108] sm:$0xff]
    %v290 = vld [vmem:[#allocation3 + $0x110] sm:$0xff]
    %v291 = vld [vmem:[#allocation3 + $0x118] sm:$0xff]
    %v292 = vld [vmem:[#allocation3 + $0x120] sm:$0xff]
    %v293 = vld [vmem:[#allocation3 + $0x128] sm:$0xff]
    %v294 = vld [vmem:[#allocation3 + $0x130] sm:$0xff]
    %v295 = vld [vmem:[#allocation3 + $0x138] sm:$0xff]
    %v296 = vld [vmem:[#allocation3 + $0x140] sm:$0xff]
    %v297 = vld [vmem:[#allocation3 + $0x148] sm:$0xff]
    %v298 = vld [vmem:[#allocation3 + $0x150] sm:$0xff]
    %v299 = vld [vmem:[#allocation3 + $0x158] sm:$0xff]
    %v300 = vld [vmem:[#allocation3 + $0x160] sm:$0xff]
    %v301 = vld [vmem:[#allocation3 + $0x168] sm:$0xff]
    %v302 = vld [vmem:[#allocation3 + $0x170] sm:$0xff]
    %v303 = vld [vmem:[#allocation3 + $0x178] sm:$0xff]
    %v304 = vld [vmem:[%s4] sm:$0x1]
    %v305 = vlaneseq
    %v306 = vshrl.u32 %v305, 7
    %v307 = vsub.s32 0, %v306
    %v308 = vrot.slane %v304, %v307
    %309 = vmatprep.subr.mxu0 0.0
    %310 = vmatpush1.msra.mxu0 %v256
    %311 = vmatprep.subr.mxu0 0.0
    %312 = vmatpush1.msra.mxu0 %v257
    %313 = vmatprep.subr.mxu0 0.0
    %314 = vmatpush1.msra.mxu0 %v258
    %315 = vmatprep.subr.mxu0 0.0
    %316 = vmatpush1.msra.mxu0 %v259
    %317 = vmatprep.subr.mxu0 0.0
    %318 = vmatpush1.msra.mxu0 %v260
    %319 = vmatprep.subr.mxu0 0.0
    %320 = vmatpush1.msra.mxu0 %v261
    %321 = vmatprep.subr.mxu0 0.0
    %322 = vmatpush1.msra.mxu0 %v262
    %323 = vmatprep.subr.mxu0 0.0
    %324 = vmatpush1.msra.mxu0 %v263
    %325 = vmatprep.subr.mxu0 0.0
    %326 = vmatpush1.msra.mxu0 %v264
    %327 = vmatprep.subr.mxu0 0.0
    %328 = vmatpush1.msra.mxu0 %v265
    %329 = vmatprep.subr.mxu0 0.0
    %330 = vmatpush1.msra.mxu0 %v266
    %331 = vmatprep.subr.mxu0 0.0
    %332 = vmatpush1.msra.mxu0 %v267
    %333 = vmatprep.subr.mxu0 0.0
    %334 = vmatpush1.msra.mxu0 %v268
    %335 = vmatprep.subr.mxu0 0.0
    %336 = vmatpush1.msra.mxu0 %v269
    %337 = vmatprep.subr.mxu0 0.0
    %338 = vmatpush1.msra.mxu0 %v270
    %339 = vmatprep.subr.mxu0 0.0
    %340 = vmatpush1.msra.mxu0 %v271
    %341 = vmatprep.subr.mxu0 0.0
    %342 = vmatpush1.msra.mxu0 %v272
    %343 = vmatprep.subr.mxu0 0.0
    %344 = vmatpush1.msra.mxu0 %v273
    %345 = vmatprep.subr.mxu0 0.0
    %346 = vmatpush1.msra.mxu0 %v274
    %347 = vmatprep.subr.mxu0 0.0
    %348 = vmatpush1.msra.mxu0 %v275
    %349 = vmatprep.subr.mxu0 0.0
    %350 = vmatpush1.msra.mxu0 %v276
    %351 = vmatprep.subr.mxu0 0.0
    %352 = vmatpush1.msra.mxu0 %v277
    %353 = vmatprep.subr.mxu0 0.0
    %354 = vmatpush1.msra.mxu0 %v278
    %355 = vmatprep.subr.mxu0 0.0
    %356 = vmatpush1.msra.mxu0 %v279
    %357 = vmatprep.subr.mxu0 0.0
    %358 = vmatpush1.msra.mxu0 %v280
    %359 = vmatprep.subr.mxu0 0.0
    %360 = vmatpush1.msra.mxu0 %v281
    %361 = vmatprep.subr.mxu0 0.0
    %362 = vmatpush1.msra.mxu0 %v282
    %363 = vmatprep.subr.mxu0 0.0
    %364 = vmatpush1.msra.mxu0 %v283
    %365 = vmatprep.subr.mxu0 0.0
    %366 = vmatpush1.msra.mxu0 %v284
    %367 = vmatprep.subr.mxu0 0.0
    %368 = vmatpush1.msra.mxu0 %v285
    %369 = vmatprep.subr.mxu0 0.0
    %370 = vmatpush1.msra.mxu0 %v286
    %371 = vmatprep.subr.mxu0 0.0
    %372 = vmatpush1.msra.mxu0 %v287
    %373 = vmatprep.mubr.f32.mxu0 %v212
    %374 = vmatmul.mubr.f32.gmra.mrb[0].mxu0 %v239
    %v375 = vpop.f32.mrb[0].mxu0
    %v376 = vadd.f32 %v308, %v375
    %v377 = vpop.f32.mrb[0].mxu0
    %378 = vmatprep.mubr.f32.mxu0 %v217
    %379 = vmatmul.mubr.f32.gmra.mrb[0].mxu0 %v240
    %v380 = vpop.f32.mrb[0].mxu0
    %v381 = vadd.f32 %v308, %v380
    %v382 = vpop.f32.mrb[0].mxu0
    %383 = vmatprep.mubr.f32.mxu0 %v222
    %384 = vmatmul.mubr.f32.gmra.mrb[0].mxu0 %v241
    %v385 = vpop.f32.mrb[0].mxu0
    %v386 = vadd.f32 %v308, %v385
    %v387 = vpop.f32.mrb[0].mxu0
    %388 = vmatprep.mubr.f32.mxu0 %v227
    %389 = vmatmul.mubr.f32.gmra.mrb[0].mxu0 %v242
    %v390 = vpop.f32.mrb[0].mxu0
    %v391 = vadd.f32 %v308, %v390
    %v392 = vpop.f32.mrb[0].mxu0
    %393 = vdwg.mxu0
    %394 = vmatprep.subr.mxu0 0.0
    %395 = vmatpush1.msra.mxu0 %v288
    %396 = vmatprep.subr.mxu0 0.0
    %397 = vmatpush1.msra.mxu0 %v289
    %398 = vmatprep.subr.mxu0 0.0
    %399 = vmatpush1.msra.mxu0 %v290
    %400 = vmatprep.subr.mxu0 0.0
    %401 = vmatpush1.msra.mxu0 %v291
    %402 = vmatprep.subr.mxu0 0.0
    %403 = vmatpush1.msra.mxu0 %v292
    %404 = vmatprep.subr.mxu0 0.0
    %405 = vmatpush1.msra.mxu0 %v293
    %406 = vmatprep.subr.mxu0 0.0
    %407 = vmatpush1.msra.mxu0 %v294
    %408 = vmatprep.subr.mxu0 0.0
    %409 = vmatpush1.msra.mxu0 %v295
    %410 = vmatprep.subr.mxu0 0.0
    %411 = vmatpush1.msra.mxu0 %v296
    %412 = vmatprep.subr.mxu0 0.0
    %413 = vmatpush1.msra.mxu0 %v297
    %414 = vmatprep.subr.mxu0 0.0
    %415 = vmatpush1.msra.mxu0 %v298
    %416 = vmatprep.subr.mxu0 0.0
    %417 = vmatpush1.msra.mxu0 %v299
    %418 = vmatprep.subr.mxu0 0.0
    %419 = vmatpush1.msra.mxu0 %v300
    %420 = vmatprep.subr.mxu0 0.0
    %421 = vmatpush1.msra.mxu0 %v301
    %422 = vmatprep.subr.mxu0 0.0
    %423 = vmatpush1.msra.mxu0 %v302
    %424 = vmatprep.subr.mxu0 0.0
    %425 = vmatpush1.msra.mxu0 %v303
    %426 = vmatprep.subr.mxu0 0.0
    %427 = vmatpush1.msra.mxu0 0.0
    %428 = vmatprep.subr.mxu0 0.0
    %429 = vmatpush1.msra.mxu0 0.0
    %430 = vmatprep.subr.mxu0 0.0
    %431 = vmatpush1.msra.mxu0 0.0
    %432 = vmatprep.subr.mxu0 0.0
    %433 = vmatpush1.msra.mxu0 0.0
    %434 = vmatprep.subr.mxu0 0.0
    %435 = vmatpush1.msra.mxu0 0.0
    %436 = vmatprep.subr.mxu0 0.0
    %437 = vmatpush1.msra.mxu0 0.0
    %438 = vmatprep.subr.mxu0 0.0
    %439 = vmatpush1.msra.mxu0 0.0
    %440 = vmatprep.subr.mxu0 0.0
    %441 = vmatpush1.msra.mxu0 0.0
    %442 = vmatprep.subr.mxu0 0.0
    %443 = vmatpush1.msra.mxu0 0.0
    %444 = vmatprep.subr.mxu0 0.0
    %445 = vmatpush1.msra.mxu0 0.0
    %446 = vmatprep.subr.mxu0 0.0
    %447 = vmatpush1.msra.mxu0 0.0
    %448 = vmatprep.subr.mxu0 0.0
    %449 = vmatpush1.msra.mxu0 0.0
    %450 = vmatprep.subr.mxu0 0.0
    %451 = vmatpush1.msra.mxu0 0.0
    %452 = vmatprep.subr.mxu0 0.0
    %453 = vmatpush1.msra.mxu0 0.0
    %454 = vmatprep.subr.mxu0 0.0
    %455 = vmatpush1.msra.mxu0 0.0
    %456 = vmatprep.subr.mxu0 0.0
    %457 = vmatpush1.msra.mxu0 0.0
    %458 = vmatprep.mubr.f32.mxu0 0.0
    %459 = vmatmul.mubr.f32.gmra.mrb[0].mxu0 %v252
    %v460 = vpop.f32.mrb[0].mxu0
    %v461 = vadd.f32 %v376, %v460
    %v462 = vpop.f32.mrb[0].mxu0
    %463 = vmatprep.mubr.f32.mxu0 0.0
    %464 = vmatmul.mubr.f32.gmra.mrb[0].mxu0 %v253
    %v465 = vpop.f32.mrb[0].mxu0
    %v466 = vadd.f32 %v381, %v465
    %v467 = vpop.f32.mrb[0].mxu0
    %468 = vmatprep.mubr.f32.mxu0 0.0
    %469 = vmatmul.mubr.f32.gmra.mrb[0].mxu0 %v254
    %v470 = vpop.f32.mrb[0].mxu0
    %v471 = vadd.f32 %v386, %v470
    %v472 = vpop.f32.mrb[0].mxu0
    %473 = vmatprep.mubr.f32.mxu0 0.0
    %474 = vmatmul.mubr.f32.gmra.mrb[0].mxu0 %v255
    %v475 = vpop.f32.mrb[0].mxu0
    %v476 = vadd.f32 %v391, %v475
    %v477 = vpop.f32.mrb[0].mxu0
    %478 = vdwg.mxu0
    %v479 = vmax.f32 %v461, 0.0
    %v480 = vmax.f32 %v466, 0.0
    %v481 = vmax.f32 %v471, 0.0
    %v482 = vmax.f32 %v476, 0.0
    %v483 = vrot.slane %v479, 7
    %v484 = vrot.slane %v480, 7
    %v485 = vrot.slane %v481, 7
    %v486 = vrot.slane %v482, 7
    %v487 = vsel %vm234, %v485, %v486
    %v488 = vsel %vm234, %v484, %v485
    %v489 = vsel %vm234, %v483, %v484
    %v490 = vsel %vm234, %v486, %v483
    %v491 = vmul.f32 %v103, %v490
    %v492 = vmul.f32 %v104, %v489
    %v493 = vmul.f32 %v105, %v488
    %v494 = vmul.f32 %v106, %v487
    %v495 = vrot.slane %v479, 1
    %v496 = vrot.slane %v480, 1
    %v497 = vrot.slane %v481, 1
    %v498 = vrot.slane %v482, 1
    %v499 = vsel %vm247, %v497, %v498
    %v500 = vsel %vm247, %v496, %v497
    %v501 = vsel %vm247, %v495, %v496
    %v502 = vsel %vm247, %v498, %v495
    %v503 = vmul.f32 %v115, %v501
    %v504 = vmul.f32 %v116, %v500
    %v505 = vmul.f32 %v117, %v499
    %v506 = vmul.f32 %v118, %v502
    %s507 = scalar_lea.vmem [#allocation3], 384
    %v508 = vld [vmem:[%s507] sm:$0xff]
    %v509 = vld [vmem:[%s507 + $0x8] sm:$0xff]
    %v510 = vld [vmem:[%s507 + $0x10] sm:$0xff]
    %v511 = vld [vmem:[%s507 + $0x18] sm:$0xff]
    %v512 = vld [vmem:[%s507 + $0x20] sm:$0xff]
    %v513 = vld [vmem:[%s507 + $0x28] sm:$0xff]
    %v514 = vld [vmem:[%s507 + $0x30] sm:$0xff]
    %v515 = vld [vmem:[%s507 + $0x38] sm:$0xff]
    %v516 = vld [vmem:[%s507 + $0x40] sm:$0xff]
    %v517 = vld [vmem:[%s507 + $0x48] sm:$0xff]
    %v518 = vld [vmem:[%s507 + $0x50] sm:$0xff]
    %v519 = vld [vmem:[%s507 + $0x58] sm:$0xff]
    %v520 = vld [vmem:[%s507 + $0x60] sm:$0xff]
    %v521 = vld [vmem:[%s507 + $0x68] sm:$0xff]
    %v522 = vld [vmem:[%s507 + $0x70] sm:$0xff]
    %v523 = vld [vmem:[%s507 + $0x78] sm:$0xff]
    %v524 = vld [vmem:[%s507 + $0x80] sm:$0xff]
    %v525 = vld [vmem:[%s507 + $0x88] sm:$0xff]
    %v526 = vld [vmem:[%s507 + $0x90] sm:$0xff]
    %v527 = vld [vmem:[%s507 + $0x98] sm:$0xff]
    %v528 = vld [vmem:[%s507 + $0xa0] sm:$0xff]
    %v529 = vld [vmem:[%s507 + $0xa8] sm:$0xff]
    %v530 = vld [vmem:[%s507 + $0xb0] sm:$0xff]
    %v531 = vld [vmem:[%s507 + $0xb8] sm:$0xff]
    %v532 = vld [vmem:[%s507 + $0xc0] sm:$0xff]
    %v533 = vld [vmem:[%s507 + $0xc8] sm:$0xff]
    %v534 = vld [vmem:[%s507 + $0xd0] sm:$0xff]
    %v535 = vld [vmem:[%s507 + $0xd8] sm:$0xff]
    %v536 = vld [vmem:[%s507 + $0xe0] sm:$0xff]
    %v537 = vld [vmem:[%s507 + $0xe8] sm:$0xff]
    %v538 = vld [vmem:[%s507 + $0xf0] sm:$0xff]
    %v539 = vld [vmem:[%s507 + $0xf8] sm:$0xff]
    %v540 = vld [vmem:[%s507 + $0x100] sm:$0xff]
    %v541 = vld [vmem:[%s507 + $0x108] sm:$0xff]
    %v542 = vld [vmem:[%s507 + $0x110] sm:$0xff]
    %v543 = vld [vmem:[%s507 + $0x118] sm:$0xff]
    %v544 = vld [vmem:[%s507 + $0x120] sm:$0xff]
    %v545 = vld [vmem:[%s507 + $0x128] sm:$0xff]
    %v546 = vld [vmem:[%s507 + $0x130] sm:$0xff]
    %v547 = vld [vmem:[%s507 + $0x138] sm:$0xff]
    %v548 = vld [vmem:[%s507 + $0x140] sm:$0xff]
    %v549 = vld [vmem:[%s507 + $0x148] sm:$0xff]
    %v550 = vld [vmem:[%s507 + $0x150] sm:$0xff]
    %v551 = vld [vmem:[%s507 + $0x158] sm:$0xff]
    %v552 = vld [vmem:[%s507 + $0x160] sm:$0xff]
    %v553 = vld [vmem:[%s507 + $0x168] sm:$0xff]
    %v554 = vld [vmem:[%s507 + $0x170] sm:$0xff]
    %v555 = vld [vmem:[%s507 + $0x178] sm:$0xff]
    %v556 = vld [vmem:[%s4 + $0x1] sm:$0x1]
    %v557 = vlaneseq
    %v558 = vshrl.u32 %v557, 7
    %v559 = vsub.s32 0, %v558
    %v560 = vrot.slane %v556, %v559
    %561 = vmatprep.subr.mxu0 0.0
    %562 = vmatpush1.msra.mxu0 %v508
    %563 = vmatprep.subr.mxu0 0.0
    %564 = vmatpush1.msra.mxu0 %v509
    %565 = vmatprep.subr.mxu0 0.0
    %566 = vmatpush1.msra.mxu0 %v510
    %567 = vmatprep.subr.mxu0 0.0
    %568 = vmatpush1.msra.mxu0 %v511
    %569 = vmatprep.subr.mxu0 0.0
    %570 = vmatpush1.msra.mxu0 %v512
    %571 = vmatprep.subr.mxu0 0.0
    %572 = vmatpush1.msra.mxu0 %v513
    %573 = vmatprep.subr.mxu0 0.0
    %574 = vmatpush1.msra.mxu0 %v514
    %575 = vmatprep.subr.mxu0 0.0
    %576 = vmatpush1.msra.mxu0 %v515
    %577 = vmatprep.subr.mxu0 0.0
    %578 = vmatpush1.msra.mxu0 %v516
    %579 = vmatprep.subr.mxu0 0.0
    %580 = vmatpush1.msra.mxu0 %v517
    %581 = vmatprep.subr.mxu0 0.0
    %582 = vmatpush1.msra.mxu0 %v518
    %583 = vmatprep.subr.mxu0 0.0
    %584 = vmatpush1.msra.mxu0 %v519
    %585 = vmatprep.subr.mxu0 0.0
    %586 = vmatpush1.msra.mxu0 %v520
    %587 = vmatprep.subr.mxu0 0.0
    %588 = vmatpush1.msra.mxu0 %v521
    %589 = vmatprep.subr.mxu0 0.0
    %590 = vmatpush1.msra.mxu0 %v522
    %591 = vmatprep.subr.mxu0 0.0
    %592 = vmatpush1.msra.mxu0 %v523
    %593 = vmatprep.subr.mxu0 0.0
    %594 = vmatpush1.msra.mxu0 %v524
    %595 = vmatprep.subr.mxu0 0.0
    %596 = vmatpush1.msra.mxu0 %v525
    %597 = vmatprep.subr.mxu0 0.0
    %598 = vmatpush1.msra.mxu0 %v526
    %599 = vmatprep.subr.mxu0 0.0
    %600 = vmatpush1.msra.mxu0 %v527
    %601 = vmatprep.subr.mxu0 0.0
    %602 = vmatpush1.msra.mxu0 %v528
    %603 = vmatprep.subr.mxu0 0.0
    %604 = vmatpush1.msra.mxu0 %v529
    %605 = vmatprep.subr.mxu0 0.0
    %606 = vmatpush1.msra.mxu0 %v530
    %607 = vmatprep.subr.mxu0 0.0
    %608 = vmatpush1.msra.mxu0 %v531
    %609 = vmatprep.subr.mxu0 0.0
    %610 = vmatpush1.msra.mxu0 %v532
    %611 = vmatprep.subr.mxu0 0.0
    %612 = vmatpush1.msra.mxu0 %v533
    %613 = vmatprep.subr.mxu0 0.0
    %614 = vmatpush1.msra.mxu0 %v534
    %615 = vmatprep.subr.mxu0 0.0
    %616 = vmatpush1.msra.mxu0 %v535
    %617 = vmatprep.subr.mxu0 0.0
    %618 = vmatpush1.msra.mxu0 %v536
    %619 = vmatprep.subr.mxu0 0.0
    %620 = vmatpush1.msra.mxu0 %v537
    %621 = vmatprep.subr.mxu0 0.0
    %622 = vmatpush1.msra.mxu0 %v538
    %623 = vmatprep.subr.mxu0 0.0
    %624 = vmatpush1.msra.mxu0 %v539
    %625 = vmatprep.mubr.f32.mxu0 %v479
    %626 = vmatmul.mubr.f32.gmra.mrb[0].mxu0 %v491
    %v627 = vpop.f32.mrb[0].mxu0
    %v628 = vadd.f32 %v560, %v627
    %v629 = vpop.f32.mrb[0].mxu0
    %630 = vmatprep.mubr.f32.mxu0 %v480
    %631 = vmatmul.mubr.f32.gmra.mrb[0].mxu0 %v492
    %v632 = vpop.f32.mrb[0].mxu0
    %v633 = vadd.f32 %v560, %v632
    %v634 = vpop.f32.mrb[0].mxu0
    %635 = vmatprep.mubr.f32.mxu0 %v481
    %636 = vmatmul.mubr.f32.gmra.mrb[0].mxu0 %v493
    %v637 = vpop.f32.mrb[0].mxu0
    %v638 = vadd.f32 %v560, %v637
    %v639 = vpop.f32.mrb[0].mxu0
    %640 = vmatprep.mubr.f32.mxu0 %v482
    %641 = vmatmul.mubr.f32.gmra.mrb[0].mxu0 %v494
    %v642 = vpop.f32.mrb[0].mxu0
    %v643 = vadd.f32 %v560, %v642
    %v644 = vpop.f32.mrb[0].mxu0
    %645 = vdwg.mxu0
    %646 = vmatprep.subr.mxu0 0.0
    %647 = vmatpush1.msra.mxu0 %v540
    %648 = vmatprep.subr.mxu0 0.0
    %649 = vmatpush1.msra.mxu0 %v541
    %650 = vmatprep.subr.mxu0 0.0
    %651 = vmatpush1.msra.mxu0 %v542
    %652 = vmatprep.subr.mxu0 0.0
    %653 = vmatpush1.msra.mxu0 %v543
    %654 = vmatprep.subr.mxu0 0.0
    %655 = vmatpush1.msra.mxu0 %v544
    %656 = vmatprep.subr.mxu0 0.0
    %657 = vmatpush1.msra.mxu0 %v545
    %658 = vmatprep.subr.mxu0 0.0
    %659 = vmatpush1.msra.mxu0 %v546
    %660 = vmatprep.subr.mxu0 0.0
    %661 = vmatpush1.msra.mxu0 %v547
    %662 = vmatprep.subr.mxu0 0.0
    %663 = vmatpush1.msra.mxu0 %v548
    %664 = vmatprep.subr.mxu0 0.0
    %665 = vmatpush1.msra.mxu0 %v549
    %666 = vmatprep.subr.mxu0 0.0
    %667 = vmatpush1.msra.mxu0 %v550
    %668 = vmatprep.subr.mxu0 0.0
    %669 = vmatpush1.msra.mxu0 %v551
    %670 = vmatprep.subr.mxu0 0.0
    %671 = vmatpush1.msra.mxu0 %v552
    %672 = vmatprep.subr.mxu0 0.0
    %673 = vmatpush1.msra.mxu0 %v553
    %674 = vmatprep.subr.mxu0 0.0
    %675 = vmatpush1.msra.mxu0 %v554
    %676 = vmatprep.subr.mxu0 0.0
    %677 = vmatpush1.msra.mxu0 %v555
    %678 = vmatprep.subr.mxu0 0.0
    %679 = vmatpush1.msra.mxu0 0.0
    %680 = vmatprep.subr.mxu0 0.0
    %681 = vmatpush1.msra.mxu0 0.0
    %682 = vmatprep.subr.mxu0 0.0
    %683 = vmatpush1.msra.mxu0 0.0
    %684 = vmatprep.subr.mxu0 0.0
    %685 = vmatpush1.msra.mxu0 0.0
    %686 = vmatprep.subr.mxu0 0.0
    %687 = vmatpush1.msra.mxu0 0.0
    %688 = vmatprep.subr.mxu0 0.0
    %689 = vmatpush1.msra.mxu0 0.0
    %690 = vmatprep.subr.mxu0 0.0
    %691 = vmatpush1.msra.mxu0 0.0
    %692 = vmatprep.subr.mxu0 0.0
    %693 = vmatpush1.msra.mxu0 0.0
    %694 = vmatprep.subr.mxu0 0.0
    %695 = vmatpush1.msra.mxu0 0.0
    %696 = vmatprep.subr.mxu0 0.0
    %697 = vmatpush1.msra.mxu0 0.0
    %698 = vmatprep.subr.mxu0 0.0
    %699 = vmatpush1.msra.mxu0 0.0
    %700 = vmatprep.subr.mxu0 0.0
    %701 = vmatpush1.msra.mxu0 0.0
    %702 = vmatprep.subr.mxu0 0.0
    %703 = vmatpush1.msra.mxu0 0.0
    %704 = vmatprep.subr.mxu0 0.0
    %705 = vmatpush1.msra.mxu0 0.0
    %706 = vmatprep.subr.mxu0 0.0
    %707 = vmatpush1.msra.mxu0 0.0
    %708 = vmatprep.subr.mxu0 0.0
    %709 = vmatpush1.msra.mxu0 0.0
    %710 = vmatprep.mubr.f32.mxu0 0.0
    %711 = vmatmul.mubr.f32.gmra.mrb[0].mxu0 %v503
    %v712 = vpop.f32.mrb[0].mxu0
    %v713 = vadd.f32 %v628, %v712
    %v714 = vpop.f32.mrb[0].mxu0
    %715 = vmatprep.mubr.f32.mxu0 0.0
    %716 = vmatmul.mubr.f32.gmra.mrb[0].mxu0 %v504
    %v717 = vpop.f32.mrb[0].mxu0
    %v718 = vadd.f32 %v633, %v717
    %v719 = vpop.f32.mrb[0].mxu0
    %720 = vmatprep.mubr.f32.mxu0 0.0
    %721 = vmatmul.mubr.f32.gmra.mrb[0].mxu0 %v505
    %v722 = vpop.f32.mrb[0].mxu0
    %v723 = vadd.f32 %v638, %v722
    %v724 = vpop.f32.mrb[0].mxu0
    %725 = vmatprep.mubr.f32.mxu0 0.0
    %726 = vmatmul.mubr.f32.gmra.mrb[0].mxu0 %v506
    %v727 = vpop.f32.mrb[0].mxu0
    %v728 = vadd.f32 %v643, %v727
    %v729 = vpop.f32.mrb[0].mxu0
    %730 = vdwg.mxu0
    %v731 = vmax.f32 %v713, 0.0
    %v732 = vmax.f32 %v718, 0.0
    %v733 = vmax.f32 %v723, 0.0
    %v734 = vmax.f32 %v728, 0.0
    %v735 = vrot.slane %v731, 7
    %v736 = vrot.slane %v732, 7
    %v737 = vrot.slane %v733, 7
    %v738 = vrot.slane %v734, 7
    %v739 = vsel %vm234, %v737, %v738
    %v740 = vsel %vm234, %v736, %v737
    %v741 = vsel %vm234, %v735, %v736
    %v742 = vsel %vm234, %v738, %v735
    %v743 = vmul.f32 %v103, %v742
    %v744 = vmul.f32 %v104, %v741
    %v745 = vmul.f32 %v105, %v740
    %v746 = vmul.f32 %v106, %v739
    %v747 = vrot.slane %v731, 1
    %v748 = vrot.slane %v732, 1
    %v749 = vrot.slane %v733, 1
    %v750 = vrot.slane %v734, 1
    %v751 = vsel %vm247, %v749, %v750
    %v752 = vsel %vm247, %v748, %v749
    %v753 = vsel %vm247, %v747, %v748
    %v754 = vsel %vm247, %v750, %v747
    %v755 = vmul.f32 %v115, %v753
    %v756 = vmul.f32 %v116, %v752
    %v757 = vmul.f32 %v117, %v751
    %v758 = vmul.f32 %v118, %v754
    %s759 = scalar_lea.vmem [#allocation3], 768
    %v760 = vld [vmem:[%s759] sm:$0xff]
    %v761 = vld [vmem:[%s759 + $0x8] sm:$0xff]
    %v762 = vld [vmem:[%s759 + $0x10] sm:$0xff]
    %v763 = vld [vmem:[%s759 + $0x18] sm:$0xff]
    %v764 = vld [vmem:[%s759 + $0x20] sm:$0xff]
    %v765 = vld [vmem:[%s759 + $0x28] sm:$0xff]
    %v766 = vld [vmem:[%s759 + $0x30] sm:$0xff]
    %v767 = vld [vmem:[%s759 + $0x38] sm:$0xff]
    %v768 = vld [vmem:[%s759 + $0x40] sm:$0xff]
    %v769 = vld [vmem:[%s759 + $0x48] sm:$0xff]
    %v770 = vld [vmem:[%s759 + $0x50] sm:$0xff]
    %v771 = vld [vmem:[%s759 + $0x58] sm:$0xff]
    %v772 = vld [vmem:[%s759 + $0x60] sm:$0xff]
    %v773 = vld [vmem:[%s759 + $0x68] sm:$0xff]
    %v774 = vld [vmem:[%s759 + $0x70] sm:$0xff]
    %v775 = vld [vmem:[%s759 + $0x78] sm:$0xff]
    %v776 = vld [vmem:[%s759 + $0x80] sm:$0xff]
    %v777 = vld [vmem:[%s759 + $0x88] sm:$0xff]
    %v778 = vld [vmem:[%s759 + $0x90] sm:$0xff]
    %v779 = vld [vmem:[%s759 + $0x98] sm:$0xff]
    %v780 = vld [vmem:[%s759 + $0xa0] sm:$0xff]
    %v781 = vld [vmem:[%s759 + $0xa8] sm:$0xff]
    %v782 = vld [vmem:[%s759 + $0xb0] sm:$0xff]
    %v783 = vld [vmem:[%s759 + $0xb8] sm:$0xff]
    %v784 = vld [vmem:[%s759 + $0xc0] sm:$0xff]
    %v785 = vld [vmem:[%s759 + $0xc8] sm:$0xff]
    %v786 = vld [vmem:[%s759 + $0xd0] sm:$0xff]
    %v787 = vld [vmem:[%s759 + $0xd8] sm:$0xff]
    %v788 = vld [vmem:[%s759 + $0xe0] sm:$0xff]
    %v789 = vld [vmem:[%s759 + $0xe8] sm:$0xff]
    %v790 = vld [vmem:[%s759 + $0xf0] sm:$0xff]
    %v791 = vld [vmem:[%s759 + $0xf8] sm:$0xff]
    %v792 = vld [vmem:[%s759 + $0x100] sm:$0xff]
    %v793 = vld [vmem:[%s759 + $0x108] sm:$0xff]
    %v794 = vld [vmem:[%s759 + $0x110] sm:$0xff]
    %v795 = vld [vmem:[%s759 + $0x118] sm:$0xff]
    %v796 = vld [vmem:[%s759 + $0x120] sm:$0xff]
    %v797 = vld [vmem:[%s759 + $0x128] sm:$0xff]
    %v798 = vld [vmem:[%s759 + $0x130] sm:$0xff]
    %v799 = vld [vmem:[%s759 + $0x138] sm:$0xff]
    %v800 = vld [vmem:[%s759 + $0x140] sm:$0xff]
    %v801 = vld [vmem:[%s759 + $0x148] sm:$0xff]
    %v802 = vld [vmem:[%s759 + $0x150] sm:$0xff]
    %v803 = vld [vmem:[%s759 + $0x158] sm:$0xff]
    %v804 = vld [vmem:[%s759 + $0x160] sm:$0xff]
    %v805 = vld [vmem:[%s759 + $0x168] sm:$0xff]
    %v806 = vld [vmem:[%s759 + $0x170] sm:$0xff]
    %v807 = vld [vmem:[%s759 + $0x178] sm:$0xff]
    %v808 = vld [vmem:[%s4 + $0x2] sm:$0x1]
    %v809 = vlaneseq
    %v810 = vshrl.u32 %v809, 7
    %v811 = vsub.s32 0, %v810
    %v812 = vrot.slane %v808, %v811
    %813 = vmatprep.subr.mxu0 0.0
    %814 = vmatpush1.msra.mxu0 %v760
    %815 = vmatprep.subr.mxu0 0.0
    %816 = vmatpush1.msra.mxu0 %v761
    %817 = vmatprep.subr.mxu0 0.0
    %818 = vmatpush1.msra.mxu0 %v762
    %819 = vmatprep.subr.mxu0 0.0
    %820 = vmatpush1.msra.mxu0 %v763
    %821 = vmatprep.subr.mxu0 0.0
    %822 = vmatpush1.msra.mxu0 %v764
    %823 = vmatprep.subr.mxu0 0.0
    %824 = vmatpush1.msra.mxu0 %v765
    %825 = vmatprep.subr.mxu0 0.0
    %826 = vmatpush1.msra.mxu0 %v766
    %827 = vmatprep.subr.mxu0 0.0
    %828 = vmatpush1.msra.mxu0 %v767
    %829 = vmatprep.subr.mxu0 0.0
    %830 = vmatpush1.msra.mxu0 %v768
    %831 = vmatprep.subr.mxu0 0.0
    %832 = vmatpush1.msra.mxu0 %v769
    %833 = vmatprep.subr.mxu0 0.0
    %834 = vmatpush1.msra.mxu0 %v770
    %835 = vmatprep.subr.mxu0 0.0
    %836 = vmatpush1.msra.mxu0 %v771
    %837 = vmatprep.subr.mxu0 0.0
    %838 = vmatpush1.msra.mxu0 %v772
    %839 = vmatprep.subr.mxu0 0.0
    %840 = vmatpush1.msra.mxu0 %v773
    %841 = vmatprep.subr.mxu0 0.0
    %842 = vmatpush1.msra.mxu0 %v774
    %843 = vmatprep.subr.mxu0 0.0
    %844 = vmatpush1.msra.mxu0 %v775
    %845 = vmatprep.subr.mxu0 0.0
    %846 = vmatpush1.msra.mxu0 %v776
    %847 = vmatprep.subr.mxu0 0.0
    %848 = vmatpush1.msra.mxu0 %v777
    %849 = vmatprep.subr.mxu0 0.0
    %850 = vmatpush1.msra.mxu0 %v778
    %851 = vmatprep.subr.mxu0 0.0
    %852 = vmatpush1.msra.mxu0 %v779
    %853 = vmatprep.subr.mxu0 0.0
    %854 = vmatpush1.msra.mxu0 %v780
    %855 = vmatprep.subr.mxu0 0.0
    %856 = vmatpush1.msra.mxu0 %v781
    %857 = vmatprep.subr.mxu0 0.0
    %858 = vmatpush1.msra.mxu0 %v782
    %859 = vmatprep.subr.mxu0 0.0
    %860 = vmatpush1.msra.mxu0 %v783
    %861 = vmatprep.subr.mxu0 0.0
    %862 = vmatpush1.msra.mxu0 %v784
    %863 = vmatprep.subr.mxu0 0.0
    %864 = vmatpush1.msra.mxu0 %v785
    %865 = vmatprep.subr.mxu0 0.0
    %866 = vmatpush1.msra.mxu0 %v786
    %867 = vmatprep.subr.mxu0 0.0
    %868 = vmatpush1.msra.mxu0 %v787
    %869 = vmatprep.subr.mxu0 0.0
    %870 = vmatpush1.msra.mxu0 %v788
    %871 = vmatprep.subr.mxu0 0.0
    %872 = vmatpush1.msra.mxu0 %v789
    %873 = vmatprep.subr.mxu0 0.0
    %874 = vmatpush1.msra.mxu0 %v790
    %875 = vmatprep.subr.mxu0 0.0
    %876 = vmatpush1.msra.mxu0 %v791
    %877 = vmatprep.mubr.f32.mxu0 %v731
    %878 = vmatmul.mubr.f32.gmra.mrb[0].mxu0 %v743
    %v879 = vpop.f32.mrb[0].mxu0
    %v880 = vadd.f32 %v812, %v879
    %v881 = vpop.f32.mrb[0].mxu0
    %882 = vmatprep.mubr.f32.mxu0 %v732
    %883 = vmatmul.mubr.f32.gmra.mrb[0].mxu0 %v744
    %v884 = vpop.f32.mrb[0].mxu0
    %v885 = vadd.f32 %v812, %v884
    %v886 = vpop.f32.mrb[0].mxu0
    %887 = vmatprep.mubr.f32.mxu0 %v733
    %888 = vmatmul.mubr.f32.gmra.mrb[0].mxu0 %v745
    %v889 = vpop.f32.mrb[0].mxu0
    %v890 = vadd.f32 %v812, %v889
    %v891 = vpop.f32.mrb[0].mxu0
    %892 = vmatprep.mubr.f32.mxu0 %v734
    %893 = vmatmul.mubr.f32.gmra.mrb[0].mxu0 %v746
    %v894 = vpop.f32.mrb[0].mxu0
    %v895 = vadd.f32 %v812, %v894
    %v896 = vpop.f32.mrb[0].mxu0
    %897 = vdwg.mxu0
    %898 = vmatprep.subr.mxu0 0.0
    %899 = vmatpush1.msra.mxu0 %v792
    %900 = vmatprep.subr.mxu0 0.0
    %901 = vmatpush1.msra.mxu0 %v793
    %902 = vmatprep.subr.mxu0 0.0
    %903 = vmatpush1.msra.mxu0 %v794
    %904 = vmatprep.subr.mxu0 0.0
    %905 = vmatpush1.msra.mxu0 %v795
    %906 = vmatprep.subr.mxu0 0.0
    %907 = vmatpush1.msra.mxu0 %v796
    %908 = vmatprep.subr.mxu0 0.0
    %909 = vmatpush1.msra.mxu0 %v797
    %910 = vmatprep.subr.mxu0 0.0
    %911 = vmatpush1.msra.mxu0 %v798
    %912 = vmatprep.subr.mxu0 0.0
    %913 = vmatpush1.msra.mxu0 %v799
    %914 = vmatprep.subr.mxu0 0.0
    %915 = vmatpush1.msra.mxu0 %v800
    %916 = vmatprep.subr.mxu0 0.0
    %917 = vmatpush1.msra.mxu0 %v801
    %918 = vmatprep.subr.mxu0 0.0
    %919 = vmatpush1.msra.mxu0 %v802
    %920 = vmatprep.subr.mxu0 0.0
    %921 = vmatpush1.msra.mxu0 %v803
    %922 = vmatprep.subr.mxu0 0.0
    %923 = vmatpush1.msra.mxu0 %v804
    %924 = vmatprep.subr.mxu0 0.0
    %925 = vmatpush1.msra.mxu0 %v805
    %926 = vmatprep.subr.mxu0 0.0
    %927 = vmatpush1.msra.mxu0 %v806
    %928 = vmatprep.subr.mxu0 0.0
    %929 = vmatpush1.msra.mxu0 %v807
    %930 = vmatprep.subr.mxu0 0.0
    %931 = vmatpush1.msra.mxu0 0.0
    %932 = vmatprep.subr.mxu0 0.0
    %933 = vmatpush1.msra.mxu0 0.0
    %934 = vmatprep.subr.mxu0 0.0
    %935 = vmatpush1.msra.mxu0 0.0
    %936 = vmatprep.subr.mxu0 0.0
    %937 = vmatpush1.msra.mxu0 0.0
    %938 = vmatprep.subr.mxu0 0.0
    %939 = vmatpush1.msra.mxu0 0.0
    %940 = vmatprep.subr.mxu0 0.0
    %941 = vmatpush1.msra.mxu0 0.0
    %942 = vmatprep.subr.mxu0 0.0
    %943 = vmatpush1.msra.mxu0 0.0
    %944 = vmatprep.subr.mxu0 0.0
    %945 = vmatpush1.msra.mxu0 0.0
    %946 = vmatprep.subr.mxu0 0.0
    %947 = vmatpush1.msra.mxu0 0.0
    %948 = vmatprep.subr.mxu0 0.0
    %949 = vmatpush1.msra.mxu0 0.0
    %950 = vmatprep.subr.mxu0 0.0
    %951 = vmatpush1.msra.mxu0 0.0
    %952 = vmatprep.subr.mxu0 0.0
    %953 = vmatpush1.msra.mxu0 0.0
    %954 = vmatprep.subr.mxu0 0.0
    %955 = vmatpush1.msra.mxu0 0.0
    %956 = vmatprep.subr.mxu0 0.0
    %957 = vmatpush1.msra.mxu0 0.0
    %958 = vmatprep.subr.mxu0 0.0
    %959 = vmatpush1.msra.mxu0 0.0
    %960 = vmatprep.subr.mxu0 0.0
    %961 = vmatpush1.msra.mxu0 0.0
    %962 = vmatprep.mubr.f32.mxu0 0.0
    %963 = vmatmul.mubr.f32.gmra.mrb[0].mxu0 %v755
    %v964 = vpop.f32.mrb[0].mxu0
    %v965 = vadd.f32 %v880, %v964
    %v966 = vpop.f32.mrb[0].mxu0
    %967 = vmatprep.mubr.f32.mxu0 0.0
    %968 = vmatmul.mubr.f32.gmra.mrb[0].mxu0 %v756
    %v969 = vpop.f32.mrb[0].mxu0
    %v970 = vadd.f32 %v885, %v969
    %v971 = vpop.f32.mrb[0].mxu0
    %972 = vmatprep.mubr.f32.mxu0 0.0
    %973 = vmatmul.mubr.f32.gmra.mrb[0].mxu0 %v757
    %v974 = vpop.f32.mrb[0].mxu0
    %v975 = vadd.f32 %v890, %v974
    %v976 = vpop.f32.mrb[0].mxu0
    %977 = vmatprep.mubr.f32.mxu0 0.0
    %978 = vmatmul.mubr.f32.gmra.mrb[0].mxu0 %v758
    %v979 = vpop.f32.mrb[0].mxu0
    %v980 = vadd.f32 %v895, %v979
    %v981 = vpop.f32.mrb[0].mxu0
    %982 = vdwg.mxu0
    %v983 = vmax.f32 %v965, 0.0
    %v984 = vmax.f32 %v970, 0.0
    %v985 = vmax.f32 %v975, 0.0
    %v986 = vmax.f32 %v980, 0.0
    %v987 = vrot.slane %v983, 7
    %v988 = vrot.slane %v984, 7
    %v989 = vrot.slane %v985, 7
    %v990 = vrot.slane %v986, 7
    %v991 = vsel %vm234, %v989, %v990
    %v992 = vsel %vm234, %v988, %v989
    %v993 = vsel %vm234, %v987, %v988
    %v994 = vsel %vm234, %v990, %v987
    %v995 = vmul.f32 %v103, %v994
    %v996 = vmul.f32 %v104, %v993
    %v997 = vmul.f32 %v105, %v992
    %v998 = vmul.f32 %v106, %v991
    %v999 = vrot.slane %v983, 1
    %v1000 = vrot.slane %v984, 1
    %v1001 = vrot.slane %v985, 1
    %v1002 = vrot.slane %v986, 1
    %v1003 = vsel %vm247, %v1001, %v1002
    %v1004 = vsel %vm247, %v1000, %v1001
    %v1005 = vsel %vm247, %v999, %v1000
    %v1006 = vsel %vm247, %v1002, %v999
    %v1007 = vmul.f32 %v115, %v1005
    %v1008 = vmul.f32 %v116, %v1004
    %v1009 = vmul.f32 %v117, %v1003
    %v1010 = vmul.f32 %v118, %v1006
    %s1011 = scalar_lea.vmem [#allocation3], 1152
    %v1012 = vld [vmem:[%s1011] sm:$0xff]
    %v1013 = vld [vmem:[%s1011 + $0x8] sm:$0xff]
    %v1014 = vld [vmem:[%s1011 + $0x10] sm:$0xff]
    %v1015 = vld [vmem:[%s1011 + $0x18] sm:$0xff]
    %v1016 = vld [vmem:[%s1011 + $0x20] sm:$0xff]
    %v1017 = vld [vmem:[%s1011 + $0x28] sm:$0xff]
    %v1018 = vld [vmem:[%s1011 + $0x30] sm:$0xff]
    %v1019 = vld [vmem:[%s1011 + $0x38] sm:$0xff]
    %v1020 = vld [vmem:[%s1011 + $0x40] sm:$0xff]
    %v1021 = vld [vmem:[%s1011 + $0x48] sm:$0xff]
    %v1022 = vld [vmem:[%s1011 + $0x50] sm:$0xff]
    %v1023 = vld [vmem:[%s1011 + $0x58] sm:$0xff]
    %v1024 = vld [vmem:[%s1011 + $0x60] sm:$0xff]
    %v1025 = vld [vmem:[%s1011 + $0x68] sm:$0xff]
    %v1026 = vld [vmem:[%s1011 + $0x70] sm:$0xff]
    %v1027 = vld [vmem:[%s1011 + $0x78] sm:$0xff]
    %v1028 = vld [vmem:[%s1011 + $0x80] sm:$0xff]
    %v1029 = vld [vmem:[%s1011 + $0x88] sm:$0xff]
    %v1030 = vld [vmem:[%s1011 + $0x90] sm:$0xff]
    %v1031 = vld [vmem:[%s1011 + $0x98] sm:$0xff]
    %v1032 = vld [vmem:[%s1011 + $0xa0] sm:$0xff]
    %v1033 = vld [vmem:[%s1011 + $0xa8] sm:$0xff]
    %v1034 = vld [vmem:[%s1011 + $0xb0] sm:$0xff]
    %v1035 = vld [vmem:[%s1011 + $0xb8] sm:$0xff]
    %v1036 = vld [vmem:[%s1011 + $0xc0] sm:$0xff]
    %v1037 = vld [vmem:[%s1011 + $0xc8] sm:$0xff]
    %v1038 = vld [vmem:[%s1011 + $0xd0] sm:$0xff]
    %v1039 = vld [vmem:[%s1011 + $0xd8] sm:$0xff]
    %v1040 = vld [vmem:[%s1011 + $0xe0] sm:$0xff]
    %v1041 = vld [vmem:[%s1011 + $0xe8] sm:$0xff]
    %v1042 = vld [vmem:[%s1011 + $0xf0] sm:$0xff]
    %v1043 = vld [vmem:[%s1011 + $0xf8] sm:$0xff]
    %v1044 = vld [vmem:[%s1011 + $0x100] sm:$0xff]
    %v1045 = vld [vmem:[%s1011 + $0x108] sm:$0xff]
    %v1046 = vld [vmem:[%s1011 + $0x110] sm:$0xff]
    %v1047 = vld [vmem:[%s1011 + $0x118] sm:$0xff]
    %v1048 = vld [vmem:[%s1011 + $0x120] sm:$0xff]
    %v1049 = vld [vmem:[%s1011 + $0x128] sm:$0xff]
    %v1050 = vld [vmem:[%s1011 + $0x130] sm:$0xff]
    %v1051 = vld [vmem:[%s1011 + $0x138] sm:$0xff]
    %v1052 = vld [vmem:[%s1011 + $0x140] sm:$0xff]
    %v1053 = vld [vmem:[%s1011 + $0x148] sm:$0xff]
    %v1054 = vld [vmem:[%s1011 + $0x150] sm:$0xff]
    %v1055 = vld [vmem:[%s1011 + $0x158] sm:$0xff]
    %v1056 = vld [vmem:[%s1011 + $0x160] sm:$0xff]
    %v1057 = vld [vmem:[%s1011 + $0x168] sm:$0xff]
    %v1058 = vld [vmem:[%s1011 + $0x170] sm:$0xff]
    %v1059 = vld [vmem:[%s1011 + $0x178] sm:$0xff]
    %v1060 = vld [vmem:[%s4 + $0x3] sm:$0x1]
    %v1061 = vlaneseq
    %v1062 = vshrl.u32 %v1061, 7
    %v1063 = vsub.s32 0, %v1062
    %v1064 = vrot.slane %v1060, %v1063
    %1065 = vmatprep.subr.mxu0 0.0
    %1066 = vmatpush1.msra.mxu0 %v1012
    %1067 = vmatprep.subr.mxu0 0.0
    %1068 = vmatpush1.msra.mxu0 %v1013
    %1069 = vmatprep.subr.mxu0 0.0
    %1070 = vmatpush1.msra.mxu0 %v1014
    %1071 = vmatprep.subr.mxu0 0.0
    %1072 = vmatpush1.msra.mxu0 %v1015
    %1073 = vmatprep.subr.mxu0 0.0
    %1074 = vmatpush1.msra.mxu0 %v1016
    %1075 = vmatprep.subr.mxu0 0.0
    %1076 = vmatpush1.msra.mxu0 %v1017
    %1077 = vmatprep.subr.mxu0 0.0
    %1078 = vmatpush1.msra.mxu0 %v1018
    %1079 = vmatprep.subr.mxu0 0.0
    %1080 = vmatpush1.msra.mxu0 %v1019
    %1081 = vmatprep.subr.mxu0 0.0
    %1082 = vmatpush1.msra.mxu0 %v1020
    %1083 = vmatprep.subr.mxu0 0.0
    %1084 = vmatpush1.msra.mxu0 %v1021
    %1085 = vmatprep.subr.mxu0 0.0
    %1086 = vmatpush1.msra.mxu0 %v1022
    %1087 = vmatprep.subr.mxu0 0.0
    %1088 = vmatpush1.msra.mxu0 %v1023
    %1089 = vmatprep.subr.mxu0 0.0
    %1090 = vmatpush1.msra.mxu0 %v1024
    %1091 = vmatprep.subr.mxu0 0.0
    %1092 = vmatpush1.msra.mxu0 %v1025
    %1093 = vmatprep.subr.mxu0 0.0
    %1094 = vmatpush1.msra.mxu0 %v1026
    %1095 = vmatprep.subr.mxu0 0.0
    %1096 = vmatpush1.msra.mxu0 %v1027
    %1097 = vmatprep.subr.mxu0 0.0
    %1098 = vmatpush1.msra.mxu0 %v1028
    %1099 = vmatprep.subr.mxu0 0.0
    %1100 = vmatpush1.msra.mxu0 %v1029
    %1101 = vmatprep.subr.mxu0 0.0
    %1102 = vmatpush1.msra.mxu0 %v1030
    %1103 = vmatprep.subr.mxu0 0.0
    %1104 = vmatpush1.msra.mxu0 %v1031
    %1105 = vmatprep.subr.mxu0 0.0
    %1106 = vmatpush1.msra.mxu0 %v1032
    %1107 = vmatprep.subr.mxu0 0.0
    %1108 = vmatpush1.msra.mxu0 %v1033
    %1109 = vmatprep.subr.mxu0 0.0
    %1110 = vmatpush1.msra.mxu0 %v1034
    %1111 = vmatprep.subr.mxu0 0.0
    %1112 = vmatpush1.msra.mxu0 %v1035
    %1113 = vmatprep.subr.mxu0 0.0
    %1114 = vmatpush1.msra.mxu0 %v1036
    %1115 = vmatprep.subr.mxu0 0.0
    %1116 = vmatpush1.msra.mxu0 %v1037
    %1117 = vmatprep.subr.mxu0 0.0
    %1118 = vmatpush1.msra.mxu0 %v1038
    %1119 = vmatprep.subr.mxu0 0.0
    %1120 = vmatpush1.msra.mxu0 %v1039
    %1121 = vmatprep.subr.mxu0 0.0
    %1122 = vmatpush1.msra.mxu0 %v1040
    %1123 = vmatprep.subr.mxu0 0.0
    %1124 = vmatpush1.msra.mxu0 %v1041
    %1125 = vmatprep.subr.mxu0 0.0
    %1126 = vmatpush1.msra.mxu0 %v1042
    %1127 = vmatprep.subr.mxu0 0.0
    %1128 = vmatpush1.msra.mxu0 %v1043
    %1129 = vmatprep.mubr.f32.mxu0 %v983
    %1130 = vmatmul.mubr.f32.gmra.mrb[0].mxu0 %v995
    %v1131 = vpop.f32.mrb[0].mxu0
    %v1132 = vadd.f32 %v1064, %v1131
    %v1133 = vpop.f32.mrb[0].mxu0
    %1134 = vmatprep.mubr.f32.mxu0 %v984
    %1135 = vmatmul.mubr.f32.gmra.mrb[0].mxu0 %v996
    %v1136 = vpop.f32.mrb[0].mxu0
    %v1137 = vadd.f32 %v1064, %v1136
    %v1138 = vpop.f32.mrb[0].mxu0
    %1139 = vmatprep.mubr.f32.mxu0 %v985
    %1140 = vmatmul.mubr.f32.gmra.mrb[0].mxu0 %v997
    %v1141 = vpop.f32.mrb[0].mxu0
    %v1142 = vadd.f32 %v1064, %v1141
    %v1143 = vpop.f32.mrb[0].mxu0
    %1144 = vmatprep.mubr.f32.mxu0 %v986
    %1145 = vmatmul.mubr.f32.gmra.mrb[0].mxu0 %v998
    %v1146 = vpop.f32.mrb[0].mxu0
    %v1147 = vadd.f32 %v1064, %v1146
    %v1148 = vpop.f32.mrb[0].mxu0
    %1149 = vdwg.mxu0
    %1150 = vmatprep.subr.mxu0 0.0
    %1151 = vmatpush1.msra.mxu0 %v1044
    %1152 = vmatprep.subr.mxu0 0.0
    %1153 = vmatpush1.msra.mxu0 %v1045
    %1154 = vmatprep.subr.mxu0 0.0
    %1155 = vmatpush1.msra.mxu0 %v1046
    %1156 = vmatprep.subr.mxu0 0.0
    %1157 = vmatpush1.msra.mxu0 %v1047
    %1158 = vmatprep.subr.mxu0 0.0
    %1159 = vmatpush1.msra.mxu0 %v1048
    %1160 = vmatprep.subr.mxu0 0.0
    %1161 = vmatpush1.msra.mxu0 %v1049
    %1162 = vmatprep.subr.mxu0 0.0
    %1163 = vmatpush1.msra.mxu0 %v1050
    %1164 = vmatprep.subr.mxu0 0.0
    %1165 = vmatpush1.msra.mxu0 %v1051
    %1166 = vmatprep.subr.mxu0 0.0
    %1167 = vmatpush1.msra.mxu0 %v1052
    %1168 = vmatprep.subr.mxu0 0.0
    %1169 = vmatpush1.msra.mxu0 %v1053
    %1170 = vmatprep.subr.mxu0 0.0
    %1171 = vmatpush1.msra.mxu0 %v1054
    %1172 = vmatprep.subr.mxu0 0.0
    %1173 = vmatpush1.msra.mxu0 %v1055
    %1174 = vmatprep.subr.mxu0 0.0
    %1175 = vmatpush1.msra.mxu0 %v1056
    %1176 = vmatprep.subr.mxu0 0.0
    %1177 = vmatpush1.msra.mxu0 %v1057
    %1178 = vmatprep.subr.mxu0 0.0
    %1179 = vmatpush1.msra.mxu0 %v1058
    %1180 = vmatprep.subr.mxu0 0.0
    %1181 = vmatpush1.msra.mxu0 %v1059
    %1182 = vmatprep.subr.mxu0 0.0
    %1183 = vmatpush1.msra.mxu0 0.0
    %1184 = vmatprep.subr.mxu0 0.0
    %1185 = vmatpush1.msra.mxu0 0.0
    %1186 = vmatprep.subr.mxu0 0.0
    %1187 = vmatpush1.msra.mxu0 0.0
    %1188 = vmatprep.subr.mxu0 0.0
    %1189 = vmatpush1.msra.mxu0 0.0
    %1190 = vmatprep.subr.mxu0 0.0
    %1191 = vmatpush1.msra.mxu0 0.0
    %1192 = vmatprep.subr.mxu0 0.0
    %1193 = vmatpush1.msra.mxu0 0.0
    %1194 = vmatprep.subr.mxu0 0.0
    %1195 = vmatpush1.msra.mxu0 0.0
    %1196 = vmatprep.subr.mxu0 0.0
    %1197 = vmatpush1.msra.mxu0 0.0
    %1198 = vmatprep.subr.mxu0 0.0
    %1199 = vmatpush1.msra.mxu0 0.0
    %1200 = vmatprep.subr.mxu0 0.0
    %1201 = vmatpush1.msra.mxu0 0.0
    %1202 = vmatprep.subr.mxu0 0.0
    %1203 = vmatpush1.msra.mxu0 0.0
    %1204 = vmatprep.subr.mxu0 0.0
    %1205 = vmatpush1.msra.mxu0 0.0
    %1206 = vmatprep.subr.mxu0 0.0
    %1207 = vmatpush1.msra.mxu0 0.0
    %1208 = vmatprep.subr.mxu0 0.0
    %1209 = vmatpush1.msra.mxu0 0.0
    %1210 = vmatprep.subr.mxu0 0.0
    %1211 = vmatpush1.msra.mxu0 0.0
    %1212 = vmatprep.subr.mxu0 0.0
    %1213 = vmatpush1.msra.mxu0 0.0
    %1214 = vmatprep.mubr.f32.mxu0 0.0
    %1215 = vmatmul.mubr.f32.gmra.mrb[0].mxu0 %v1007
    %v1216 = vpop.f32.mrb[0].mxu0
    %v1217 = vadd.f32 %v1132, %v1216
    %v1218 = vpop.f32.mrb[0].mxu0
    %1219 = vmatprep.mubr.f32.mxu0 0.0
    %1220 = vmatmul.mubr.f32.gmra.mrb[0].mxu0 %v1008
    %v1221 = vpop.f32.mrb[0].mxu0
    %v1222 = vadd.f32 %v1137, %v1221
    %v1223 = vpop.f32.mrb[0].mxu0
    %1224 = vmatprep.mubr.f32.mxu0 0.0
    %1225 = vmatmul.mubr.f32.gmra.mrb[0].mxu0 %v1009
    %v1226 = vpop.f32.mrb[0].mxu0
    %v1227 = vadd.f32 %v1142, %v1226
    %v1228 = vpop.f32.mrb[0].mxu0
    %1229 = vmatprep.mubr.f32.mxu0 0.0
    %1230 = vmatmul.mubr.f32.gmra.mrb[0].mxu0 %v1010
    %v1231 = vpop.f32.mrb[0].mxu0
    %v1232 = vadd.f32 %v1147, %v1231
    %v1233 = vpop.f32.mrb[0].mxu0
    %1234 = vdwg.mxu0
    %v1235 = vmax.f32 %v1217, 0.0
    %v1236 = vmax.f32 %v1222, 0.0
    %v1237 = vmax.f32 %v1227, 0.0
    %v1238 = vmax.f32 %v1232, 0.0
    %v1239 = vmax.f32 %v1235, %v1236
    %v1240 = vrot.slane %v1239, 4
    %v1241 = vmax.f32 %v1239, %v1240
    %v1242 = vrot.slane %v1241, 2
    %v1243 = vmax.f32 %v1241, %v1242
    %v1244 = vrot.slane %v1243, 1
    %v1245 = vmax.f32 %v1243, %v1244
    %v1246 = vmax.f32 %v1237, %v1238
    %v1247 = vrot.slane %v1246, 4
    %v1248 = vmax.f32 %v1246, %v1247
    %v1249 = vrot.slane %v1248, 2
    %v1250 = vmax.f32 %v1248, %v1249
    %v1251 = vrot.slane %v1250, 1
    %v1252 = vmax.f32 %v1250, %v1251
    %v1253 = vld [vmem:[%s5] sm:$0x1]
    %v1255 = vlaneseq
    %v1256 = vshrl.u32 %v1255, 7
    %v1257 = vsub.s32 0, %v1256
    %v1258 = vrot.slane %v1253, %v1257
    %v1260 = vmul.f32 %v1245, %v1258
    %v1261 = vmul.f32 %v1252, %v1258
    %v1264 = vrot.slane %v1261, 7
    %vm1265 = vcmask 1041409
    %v1266 = vsel %vm1265, %v1264, %v1260
    %vm1268 = vcmask 1041408
    %v1269 = vsel %vm1268, %v1266, 0.0
    %1270 = vadd.xlane.f32.xlu0 %v1269
    %v1271 = vpop.xlane.xlu0 %1270
    %v1272 = vld [vmem:[#allocation2] sm:$0x1]
    %v1274 = vlaneseq
    %v1275 = vshrl.u32 %v1274, 7
    %v1276 = vsub.s32 0, %v1275
    %v1277 = vrot.slane %v1272, %v1276
    %v1279 = vadd.f32 %v1271, %v1277
    %v1280 = vxor.u32 %v1279, 2147483648
    %v1281 = vmul.f32 %v1280, 1.442695
    %v1282 = vpow.pop %v1281
    %v1283 = vadd.f32 %v1282, 1.0
    %v1284 = vrcp.pop %v1283
    %v1285 = vmul.f32 1.0, %v1284
    %vm1286 = vcmask 1024
    %1287 = vst.msk [vmem:[%s7] sm:$0x3] %vm1286, %v1285
    // Predicated region
    $region34: #{tpu_custom_call.1} parent=1 // pred_check
      _
    $region35: #{tpu_custom_call.1} parent=1 // pred_check_branch
      %1289 = sbr.rel (0) target = $region37
    $region36: #{tpu_custom_call.1} parent=1 // pred_region
      _
    $region37: #{tpu_custom_call.1} parent=1 // pred_fallthru
      _
    // Predicated region
    $region38: #{tpu_custom_call.1} parent=1 // pred_check
      _
    $region39: #{tpu_custom_call.1} parent=1 // pred_check_branch
      %1291 = sbr.rel (0) target = $region41
    $region40: #{tpu_custom_call.1} parent=1 // pred_region
      _
    $region41: #{tpu_custom_call.1} parent=1 // pred_fallthru
      _
    %1292 = vsyncpa [#allocation4], 1

</llo_original>
